<compile_context>
chip_gen: v7x
topology: tpu7x:2x2x1
jax: 0.10.0
libtpu: 0.0.40
codegen_flags: <defaults>
</compile_context>

<pallas_src>
import math
import numpy as np
import jax
import jax.numpy as jnp
from jax.experimental import pallas as pl
from jax.experimental.pallas import tpu as pltpu

# ---- config (small synthetic sizes consistent with the module) ----
D_MODEL = 32
DIM_K = 32
DIM_V = 32
N_HEADS = 4
FF_HIDDEN = 64
DK_H = DIM_K // N_HEADS
DV_H = DIM_V // N_HEADS
SCALE = 1.0 / math.sqrt(D_MODEL)
EPS = 1e-5
NEG_INF = -1e30
SLAB_LANES = 128
PREC = jax.lax.Precision.DEFAULT   # pin single-pass MXU precision explicitly


def positional_encoding(seq_len, d_model):
    pe = np.zeros((seq_len, d_model), dtype=np.float32)
    for pos in range(seq_len):
        for i in range(d_model):
            angle = pos / (10000 ** (2 * i / d_model))
            pe[pos, i] = math.sin(angle) if i % 2 == 0 else math.cos(angle)
    return pe


def slab_layout(B, S):
    """Row offsets of every block in the 128-lane parameter slab (all lane-0 aligned)."""
    BS = B * S
    HS = N_HEADS * BS
    off = {}
    r = 0

    def take(name, n):
        nonlocal r
        r = ((r + 7) // 8) * 8          # 8-sublane alignment for every block
        off[name] = r
        r += n

    take("wqkv", D_MODEL)   # (D, 128) [wq*scale | wk | wv | 0]
    take("wv", D_MODEL)     # (D, 64)  [wv | 0]           (cross-attention V projection)
    take("wo", DIM_V)       # (DIM_V, D)
    take("w1", D_MODEL)     # (D, FF_HIDDEN)
    take("w2t", D_MODEL)    # (D, FF_HIDDEN) = w2.T
    take("bqkv", 1)         # (1, 128) [bq*scale | bk | bv | 1]
    take("bv", 1)           # (1, 64)  [bv | 1]
    take("bo", 1)           # (1, D)
    take("b1", 1)           # (1, FF_HIDDEN)
    take("b2", 1)           # (1, D)
    take("pe", S)           # (S, D)   stored once, broadcast over batch in-kernel
    take("hm2", HS)         # (HS, 64) [head_mask | head_mask]
    take("amask", BS)       # (BS, HS) additive causal/batch mask (0 / -1e30)
    rows = ((r + 7) // 8) * 8
    return off, rows


def pack_params(params, B, S):
    """Pack all weights/biases + precomputed masks + PE into one (rows, 128) f32 slab."""
    (wq, bq, wk, bk, wv, bv, wo, bo, w1, b1, w2, b2) = [np.asarray(p, np.float32) for p in params]
    off, rows = slab_layout(B, S)
    BS = B * S
    HS = N_HEADS * BS
    slab = np.zeros((rows, SLAB_LANES), np.float32)

    # fused QKV weights; softmax scale folded into the Q columns (saves the in-kernel scale mul)
    r = off["wqkv"]
    slab[r:r + D_MODEL, 0:DIM_K] = wq * SCALE
    slab[r:r + D_MODEL, DIM_K:2 * DIM_K] = wk
    slab[r:r + D_MODEL, 2 * DIM_K:2 * DIM_K + DIM_V] = wv
    r = off["bqkv"]
    slab[r, 0:DIM_K] = bq[0] * SCALE
    slab[r, DIM_K:2 * DIM_K] = bk[0]
    slab[r, 2 * DIM_K:2 * DIM_K + DIM_V] = bv[0]
    slab[r, 2 * DIM_K + DIM_V:2 * DIM_K + 2 * DIM_V] = 1.0   # trailing ones -> softmax denominator columns

    # standalone V projection (cross-attention), same trailing-ones trick
    slab[off["wv"]:off["wv"] + D_MODEL, 0:DIM_V] = wv
    slab[off["bv"], 0:DIM_V] = bv[0]
    slab[off["bv"], DIM_V:2 * DIM_V] = 1.0

    slab[off["wo"]:off["wo"] + DIM_V, 0:D_MODEL] = wo
    slab[off["bo"], 0:D_MODEL] = bo[0]
    slab[off["w1"]:off["w1"] + D_MODEL, 0:FF_HIDDEN] = w1
    slab[off["b1"], 0:FF_HIDDEN] = b1[0]
    slab[off["w2t"]:off["w2t"] + D_MODEL, 0:FF_HIDDEN] = w2.T
    slab[off["b2"], 0:D_MODEL] = b2[0]

    # positional encoding, stored once (broadcast over batch inside the kernel)
    slab[off["pe"]:off["pe"] + S, 0:D_MODEL] = positional_encoding(S, D_MODEL)

    # head block mask: hm[h*BS + k, c] = 1 iff feature column c belongs to head h; duplicated
    # over two 32-lane halves so one multiply builds [V_stack | head_mask] for the fused dot.
    hr = np.arange(HS)[:, None] // BS
    hc = np.arange(DIM_V)[None, :] // DV_H
    hm = (hr == hc).astype(np.float32)
    slab[off["hm2"]:off["hm2"] + HS, 0:DIM_V] = hm
    slab[off["hm2"]:off["hm2"] + HS, DIM_V:2 * DIM_V] = hm

    # additive attention mask over stacked-head score columns: query i attends key j iff
    # same batch block and j <= i (causal within the batch).
    qi = np.arange(BS)[:, None]
    kj = np.arange(HS)[None, :] % BS
    attend = ((qi // S) == (kj // S)) & (kj <= qi)
    slab[off["amask"]:off["amask"] + BS, 0:HS] = np.where(attend, 0.0, NEG_INF).astype(np.float32)

    return jnp.asarray(slab)


# ----------------------------- Pallas kernel -----------------------------
def make_decoder_kernel(B, S, off):
    BS = B * S
    HS = N_HEADS * BS
    D = D_MODEL
    inv_n = 1.0 / (S * D)

    def decoder_kernel(x_ref, enc_ref, slab_ref, out_ref):
        # ---- lane-0-aligned parameter / mask views (plain vlds, no lane rotates) ----
        wqkv = slab_ref[off["wqkv"]:off["wqkv"] + D, :]                 # (D, 128) [wq*s | wk | wv | 0]
        bqkv = slab_ref[off["bqkv"]:off["bqkv"] + 1, :]                 # (1, 128) [bq*s | bk | bv | 1]
        wv = slab_ref[off["wv"]:off["wv"] + D, 0:2 * DIM_V]             # (D, 64)  [wv | 0]
        bv = slab_ref[off["bv"]:off["bv"] + 1, 0:2 * DIM_V]             # (1, 64)  [bv | 1]
        wo = slab_ref[off["wo"]:off["wo"] + DIM_V, 0:D]                 # (DIM_V, D)
        bo = slab_ref[off["bo"]:off["bo"] + 1, 0:D]
        w1 = slab_ref[off["w1"]:off["w1"] + D, 0:FF_HIDDEN]
        b1 = slab_ref[off["b1"]:off["b1"] + 1, 0:FF_HIDDEN]
        w2t = slab_ref[off["w2t"]:off["w2t"] + D, 0:FF_HIDDEN]          # w2.T
        b2 = slab_ref[off["b2"]:off["b2"] + 1, 0:D]
        pe = slab_ref[off["pe"]:off["pe"] + S, 0:D]                     # (S, D)
        hm2 = slab_ref[off["hm2"]:off["hm2"] + HS, 0:2 * DIM_V]         # (HS, 64) [head_mask | head_mask]
        amask = slab_ref[off["amask"]:off["amask"] + BS, 0:HS]          # (BS, HS)
        head_mask = hm2[:, 0:DIM_V]                                     # (HS, DIM_V)

        def attend(q, k, v1):
            # q: (BS, DIM_K) pre-scaled; k: (BS, DIM_K); v1: (BS, 2*DIM_V) = [V | 1].
            k_stack = jnp.tile(k, (N_HEADS, 1)) * head_mask             # (HS, DIM_K)
            kvm = jnp.tile(v1, (N_HEADS, 1)) * hm2                      # (HS, 64) [V_stack | head_mask]
            # all-head scores in one matmul: s[:, h*BS + j] = Q_h . K_h[j]
            s = jax.lax.dot_general(q, k_stack, (((1,), (1,)), ((), ())),
                                    precision=PREC,
                                    preferred_element_type=jnp.float32) + amask
            # row-global max is valid per head block (softmax is shift-invariant per row)
            e = jnp.exp(s - jnp.max(s, axis=-1, keepdims=True))         # (BS, HS)
            # fused numerator/denominator: one MXU push -> [unnormalized heads | per-head denom]
            nd = jnp.dot(e, kvm, precision=PREC, preferred_element_type=jnp.float32)
            heads = nd[:, 0:DIM_V] / nd[:, DIM_V:2 * DIM_V]             # exact divide (EUP slack)
            return jnp.dot(heads, wo, precision=PREC,
                           preferred_element_type=jnp.float32) + bo     # (BS, D)

        def add_norm(y):
            # LayerNorm over (S, d_model) per batch sample, unit affine; one-pass moments.
            y3 = y.reshape(B, S, D)
            mu = jnp.sum(jnp.sum(y3, axis=2, keepdims=True), axis=1, keepdims=True) * inv_n
            ms = jnp.sum(jnp.sum(y3 * y3, axis=2, keepdims=True), axis=1, keepdims=True) * inv_n
            var = jnp.maximum(ms - mu * mu, 0.0)
            return ((y3 - mu) * jax.lax.rsqrt(var + EPS)).reshape(BS, D)

        # ---- forward ----
        x = (x_ref[...] + pe[None]).reshape(BS, D)                      # PE broadcast over batch
        enc = enc_ref[...].reshape(BS, D)

        # MHA1 (self-attention): one fused QKV projection; lanes 96:128 come out as exact 1.0
        # (zero weight columns + bias of 1.0) and carry the softmax-denominator trick.
        qkv1 = jnp.dot(x, wqkv, precision=PREC, preferred_element_type=jnp.float32) + bqkv
        out1 = add_norm(x + attend(qkv1[:, 0:DIM_K],
                                   qkv1[:, DIM_K:2 * DIM_K],
                                   qkv1[:, 2 * DIM_K:2 * DIM_K + 2 * DIM_V]))

        # MHA2: Q, K from out1 (same fused projection, V part unused), V from encoder output.
        qk2 = jnp.dot(out1, wqkv, precision=PREC, preferred_element_type=jnp.float32) + bqkv
        v2 = jnp.dot(enc, wv, precision=PREC, preferred_element_type=jnp.float32) + bv
        out2 = add_norm(out1 + attend(qk2[:, 0:DIM_K], qk2[:, DIM_K:2 * DIM_K], v2))

        # Feed-forward.
        hid = jnp.maximum(jnp.dot(out2, w1, precision=PREC,
                                  preferred_element_type=jnp.float32) + b1, 0.0)
        ff = jax.lax.dot_general(hid, w2t, (((1,), (1,)), ((), ())),
                                 precision=PREC, preferred_element_type=jnp.float32) + b2
        out_ref[...] = add_norm(out2 + ff).reshape(B, S, D)

    return decoder_kernel


def decoder_forward(x, encoder_output, slab):
    B, S, D = x.shape
    off, rows = slab_layout(B, S)
    assert slab.shape == (rows, SLAB_LANES)
    kernel = make_decoder_kernel(B, S, off)
    # Single grid step: the whole (tiny) problem fits comfortably in VMEM; per-step pipeline
    # overhead would dominate any finer tiling at these sizes.
    grid_spec = pltpu.PrefetchScalarGridSpec(
        num_scalar_prefetch=0,
        grid=(1,),
        in_specs=[
            pl.BlockSpec((B, S, D), lambda i: (0, 0, 0)),               # x
            pl.BlockSpec((B, S, D), lambda i: (0, 0, 0)),               # encoder_output
            pl.BlockSpec((rows, SLAB_LANES), lambda i: (0, 0)),         # packed parameter slab
        ],
        out_specs=pl.BlockSpec((B, S, D), lambda i: (0, 0, 0)),
    )
    return pl.pallas_call(
        kernel,
        out_shape=jax.ShapeDtypeStruct((B, S, D), jnp.float32),
        grid_spec=grid_spec,
        compiler_params=pltpu.CompilerParams(dimension_semantics=("arbitrary",)),
    )(x, encoder_output, slab)


# ----------------------------- pure-JAX reference -----------------------------
def decoder_ref(x, enc, params):
    (wq, bq, wk, bk, wv, bv, wo, bo, w1, b1, w2, b2) = params
    B, S, D = x.shape
    pe = jnp.asarray(positional_encoding(S, D))
    x = x + pe[None]

    causal = (jnp.arange(S)[None, :] <= jnp.arange(S)[:, None])

    def mha(q_in, v_in):
        Q = q_in @ wq + bq[0]
        K = q_in @ wk + bk[0]
        V = v_in @ wv + bv[0]
        Qh = Q.reshape(B, S, N_HEADS, DK_H).transpose(0, 2, 1, 3)
        Kh = K.reshape(B, S, N_HEADS, DK_H).transpose(0, 2, 1, 3)
        Vh = V.reshape(B, S, N_HEADS, DV_H).transpose(0, 2, 1, 3)
        s = jnp.einsum("bhqd,bhkd->bhqk", Qh, Kh) * SCALE
        s = jnp.where(causal[None, None], s, NEG_INF)
        p = jax.nn.softmax(s, axis=-1)
        o = jnp.einsum("bhqk,bhkd->bhqd", p, Vh).transpose(0, 2, 1, 3).reshape(B, S, DIM_V)
        return o @ wo + bo[0]

    def add_norm(r, s):
        y = r + s
        mu = y.mean(axis=(1, 2), keepdims=True)
        var = ((y - mu) ** 2).mean(axis=(1, 2), keepdims=True)
        return (y - mu) / jnp.sqrt(var + EPS)

    o1 = add_norm(x, mha(x, x))
    o2 = add_norm(o1, mha(o1, enc))
    ff = jnp.maximum(o2 @ w1 + b1[0], 0.0) @ w2 + b2[0]
    return add_norm(o2, ff)


# ----------------------------- params & main -----------------------------
def init_params(key):
    ks = jax.random.split(key, 12)
    def w(k, i, o): return 0.1 * jax.random.normal(k, (i, o), jnp.float32)
    def b(k, o):    return 0.1 * jax.random.normal(k, (1, o), jnp.float32)
    return (
        w(ks[0], D_MODEL, DIM_K),   b(ks[1], DIM_K),         # Wq, bq
        w(ks[2], D_MODEL, DIM_K),   b(ks[3], DIM_K),         # Wk, bk
        w(ks[4], D_MODEL, DIM_V),   b(ks[5], DIM_V),         # Wv, bv
        w(ks[6], DIM_V, D_MODEL),   b(ks[7], D_MODEL),       # Wo, bo
        w(ks[8], D_MODEL, FF_HIDDEN), b(ks[9], FF_HIDDEN),   # FFN L1
        w(ks[10], FF_HIDDEN, D_MODEL), b(ks[11], D_MODEL),   # FFN L2
    )


if __name__ == "__main__":
    B, S = 2, 8
    key = jax.random.PRNGKey(0)
    kx, ke, kp = jax.random.split(key, 3)
    x = jax.random.normal(kx, (B, S, D_MODEL), jnp.float32)
    enc = jax.random.normal(ke, (B, S, D_MODEL), jnp.float32)
    params = init_params(kp)
    slab = pack_params(params, B, S)

    out = decoder_forward(x, enc, slab)
    out = jax.block_until_ready(out)

    ref = decoder_ref(x, enc, params)
    assert out.shape == (B, S, D_MODEL)
    np.testing.assert_allclose(np.asarray(out), np.asarray(ref), atol=2e-3, rtol=2e-3)
    print("KERNEL_OK")
</pallas_src>

<mosaic_0001>
module attributes {stable_mosaic.version = 11 : i64} {
  func.func @decoder_kernel(%arg0: i32, %arg1: memref<2x8x32xf32, #tpu.memory_space<vmem>>, %arg2: memref<2x8x32xf32, #tpu.memory_space<vmem>>, %arg3: memref<288x128xf32, #tpu.memory_space<vmem>>, %arg4: memref<2x8x32xf32, #tpu.memory_space<vmem>>) attributes {dimension_semantics = [#tpu.dimension_semantics<arbitrary>], iteration_bounds = array<i64: 1>, scalar_prefetch = 0 : i64, scratch_operands = 0 : i64, tpu.core_type = #tpu.core_type<tc>, window_params = [{pipeline_mode = #tpu.pipeline_mode<synchronous>, transform_indices = @transform_0, window_bounds = array<i64: 2, 8, 32>}, {pipeline_mode = #tpu.pipeline_mode<synchronous>, transform_indices = @transform_1, window_bounds = array<i64: 2, 8, 32>}, {pipeline_mode = #tpu.pipeline_mode<synchronous>, transform_indices = @transform_2, window_bounds = array<i64: 288, 128>}, {pipeline_mode = #tpu.pipeline_mode<synchronous>, transform_indices = @transform_3, window_bounds = array<i64: 2, 8, 32>}]} {
    %c0 = arith.constant 0 : index
    %c0_0 = arith.constant 0 : index
    %0 = vector.load %arg3[%c0, %c0_0] : memref<288x128xf32, #tpu.memory_space<vmem>>, vector<32x128xf32>
    %c160 = arith.constant 160 : index
    %c0_1 = arith.constant 0 : index
    %1 = vector.load %arg3[%c160, %c0_1] : memref<288x128xf32, #tpu.memory_space<vmem>>, vector<1x128xf32>
    %c32 = arith.constant 32 : index
    %c0_2 = arith.constant 0 : index
    %2 = vector.load %arg3[%c32, %c0_2] : memref<288x128xf32, #tpu.memory_space<vmem>>, vector<32x64xf32>
    %c168 = arith.constant 168 : index
    %c0_3 = arith.constant 0 : index
    %3 = vector.load %arg3[%c168, %c0_3] : memref<288x128xf32, #tpu.memory_space<vmem>>, vector<1x64xf32>
    %c64 = arith.constant 64 : index
    %c0_4 = arith.constant 0 : index
    %4 = vector.load %arg3[%c64, %c0_4] : memref<288x128xf32, #tpu.memory_space<vmem>>, vector<32x32xf32>
    %c176 = arith.constant 176 : index
    %c0_5 = arith.constant 0 : index
    %5 = vector.load %arg3[%c176, %c0_5] : memref<288x128xf32, #tpu.memory_space<vmem>>, vector<1x32xf32>
    %c96 = arith.constant 96 : index
    %c0_6 = arith.constant 0 : index
    %6 = vector.load %arg3[%c96, %c0_6] : memref<288x128xf32, #tpu.memory_space<vmem>>, vector<32x64xf32>
    %c184 = arith.constant 184 : index
    %c0_7 = arith.constant 0 : index
    %7 = vector.load %arg3[%c184, %c0_7] : memref<288x128xf32, #tpu.memory_space<vmem>>, vector<1x64xf32>
    %c128 = arith.constant 128 : index
    %c0_8 = arith.constant 0 : index
    %8 = vector.load %arg3[%c128, %c0_8] : memref<288x128xf32, #tpu.memory_space<vmem>>, vector<32x64xf32>
    %c192 = arith.constant 192 : index
    %c0_9 = arith.constant 0 : index
    %9 = vector.load %arg3[%c192, %c0_9] : memref<288x128xf32, #tpu.memory_space<vmem>>, vector<1x32xf32>
    %c200 = arith.constant 200 : index
    %c0_10 = arith.constant 0 : index
    %10 = vector.load %arg3[%c200, %c0_10] : memref<288x128xf32, #tpu.memory_space<vmem>>, vector<8x32xf32>
    %c208 = arith.constant 208 : index
    %c0_11 = arith.constant 0 : index
    %11 = vector.load %arg3[%c208, %c0_11] : memref<288x128xf32, #tpu.memory_space<vmem>>, vector<64x64xf32>
    %c272 = arith.constant 272 : index
    %c0_12 = arith.constant 0 : index
    %12 = vector.load %arg3[%c272, %c0_12] : memref<288x128xf32, #tpu.memory_space<vmem>>, vector<16x64xf32>
    %13 = vector.extract_strided_slice %11 {offsets = [0, 0], sizes = [64, 32], strides = [1, 1]} : vector<64x64xf32> to vector<64x32xf32>
    %c0_13 = arith.constant 0 : index
    %c0_14 = arith.constant 0 : index
    %c0_15 = arith.constant 0 : index
    %14 = vector.load %arg1[%c0_13, %c0_14, %c0_15] : memref<2x8x32xf32, #tpu.memory_space<vmem>>, vector<2x8x32xf32>
    %15 = vector.shape_cast %10 : vector<8x32xf32> to vector<1x8x32xf32>
    %16 = vector.broadcast %15 : vector<1x8x32xf32> to vector<2x8x32xf32>
    %17 = arith.addf %14, %16 : vector<2x8x32xf32>
    %18 = vector.shape_cast %17 : vector<2x8x32xf32> to vector<16x32xf32>
    %c0_16 = arith.constant 0 : index
    %c0_17 = arith.constant 0 : index
    %c0_18 = arith.constant 0 : index
    %19 = vector.load %arg2[%c0_16, %c0_17, %c0_18] : memref<2x8x32xf32, #tpu.memory_space<vmem>>, vector<2x8x32xf32>
    %20 = vector.shape_cast %19 : vector<2x8x32xf32> to vector<16x32xf32>
    %cst = arith.constant dense<0.000000e+00> : vector<16x128xf32>
    %21 = tpu.matmul %18, %0, %cst {dimension_numbers = #tpu.dot_dimension_numbers<[1], [0], [0], [1], [0, 0, 1, 1], [], []>} : vector<16x32xf32>, vector<32x128xf32>, vector<16x128xf32> -> vector<16x128xf32>
    %22 = vector.broadcast %1 : vector<1x128xf32> to vector<16x128xf32>
    %23 = arith.addf %21, %22 : vector<16x128xf32>
    %24 = vector.extract_strided_slice %23 {offsets = [0, 0], sizes = [16, 32], strides = [1, 1]} : vector<16x128xf32> to vector<16x32xf32>
    %25 = vector.extract_strided_slice %23 {offsets = [0, 32], sizes = [16, 32], strides = [1, 1]} : vector<16x128xf32> to vector<16x32xf32>
    %26 = vector.extract_strided_slice %23 {offsets = [0, 64], sizes = [16, 64], strides = [1, 1]} : vector<16x128xf32> to vector<16x64xf32>
    %27 = tpu.concatenate %25, %25, %25, %25 in 0 : vector<16x32xf32>, vector<16x32xf32>, vector<16x32xf32>, vector<16x32xf32> -> vector<64x32xf32>
    %28 = arith.mulf %27, %13 : vector<64x32xf32>
    %29 = tpu.concatenate %26, %26, %26, %26 in 0 : vector<16x64xf32>, vector<16x64xf32>, vector<16x64xf32>, vector<16x64xf32> -> vector<64x64xf32>
    %30 = arith.mulf %29, %11 : vector<64x64xf32>
    %cst_19 = arith.constant dense<0.000000e+00> : vector<16x64xf32>
    %31 = tpu.matmul %24, %28, %cst_19 {dimension_numbers = #tpu.dot_dimension_numbers<[1], [1], [0], [0], [0, 0, 1, 0], [], []>} : vector<16x32xf32>, vector<64x32xf32>, vector<16x64xf32> -> vector<16x64xf32>
    %32 = arith.addf %31, %12 : vector<16x64xf32>
    %cst_20 = arith.constant dense<0xFF800000> : vector<16xf32>
    %33 = vector.multi_reduction <maximumf>, %32, %cst_20 [1] : vector<16x64xf32> to vector<16xf32>
    %34 = vector.shape_cast %33 : vector<16xf32> to vector<16x1xf32>
    %35 = vector.broadcast %34 : vector<16x1xf32> to vector<16x64xf32>
    %36 = arith.subf %32, %35 : vector<16x64xf32>
    %37 = math.exp %36 : vector<16x64xf32>
    %cst_21 = arith.constant dense<0.000000e+00> : vector<16x64xf32>
    %38 = tpu.matmul %37, %30, %cst_21 {dimension_numbers = #tpu.dot_dimension_numbers<[1], [0], [0], [1], [0, 0, 1, 1], [], []>} : vector<16x64xf32>, vector<64x64xf32>, vector<16x64xf32> -> vector<16x64xf32>
    %39 = vector.extract_strided_slice %38 {offsets = [0, 0], sizes = [16, 32], strides = [1, 1]} : vector<16x64xf32> to vector<16x32xf32>
    %40 = vector.extract_strided_slice %38 {offsets = [0, 32], sizes = [16, 32], strides = [1, 1]} : vector<16x64xf32> to vector<16x32xf32>
    %41 = arith.divf %39, %40 : vector<16x32xf32>
    %cst_22 = arith.constant dense<0.000000e+00> : vector<16x32xf32>
    %42 = tpu.matmul %41, %4, %cst_22 {dimension_numbers = #tpu.dot_dimension_numbers<[1], [0], [0], [1], [0, 0, 1, 1], [], []>} : vector<16x32xf32>, vector<32x32xf32>, vector<16x32xf32> -> vector<16x32xf32>
    %43 = vector.broadcast %5 : vector<1x32xf32> to vector<16x32xf32>
    %44 = arith.addf %42, %43 : vector<16x32xf32>
    %45 = arith.addf %18, %44 : vector<16x32xf32>
    %46 = vector.shape_cast %45 : vector<16x32xf32> to vector<2x8x32xf32>
    %cst_23 = arith.constant dense<0.000000e+00> : vector<2x8xf32>
    %47 = vector.multi_reduction <add>, %46, %cst_23 [2] : vector<2x8x32xf32> to vector<2x8xf32>
    %48 = vector.shape_cast %47 : vector<2x8xf32> to vector<2x8x1xf32>
    %cst_24 = arith.constant dense<0.000000e+00> : vector<2x1xf32>
    %49 = vector.multi_reduction <add>, %48, %cst_24 [1] : vector<2x8x1xf32> to vector<2x1xf32>
    %50 = vector.shape_cast %49 : vector<2x1xf32> to vector<2x1x1xf32>
    %cst_25 = arith.constant 3.906250e-03 : f32
    %51 = vector.broadcast %cst_25 : f32 to vector<2x1x1xf32>
    %52 = arith.mulf %50, %51 : vector<2x1x1xf32>
    %53 = arith.mulf %46, %46 : vector<2x8x32xf32>
    %cst_26 = arith.constant dense<0.000000e+00> : vector<2x8xf32>
    %54 = vector.multi_reduction <add>, %53, %cst_26 [2] : vector<2x8x32xf32> to vector<2x8xf32>
    %55 = vector.shape_cast %54 : vector<2x8xf32> to vector<2x8x1xf32>
    %cst_27 = arith.constant dense<0.000000e+00> : vector<2x1xf32>
    %56 = vector.multi_reduction <add>, %55, %cst_27 [1] : vector<2x8x1xf32> to vector<2x1xf32>
    %57 = vector.shape_cast %56 : vector<2x1xf32> to vector<2x1x1xf32>
    %cst_28 = arith.constant 3.906250e-03 : f32
    %58 = vector.broadcast %cst_28 : f32 to vector<2x1x1xf32>
    %59 = arith.mulf %57, %58 : vector<2x1x1xf32>
    %60 = arith.mulf %52, %52 : vector<2x1x1xf32>
    %61 = arith.subf %59, %60 : vector<2x1x1xf32>
    %cst_29 = arith.constant 0.000000e+00 : f32
    %62 = vector.broadcast %cst_29 : f32 to vector<2x1x1xf32>
    %63 = arith.maximumf %61, %62 : vector<2x1x1xf32>
    %64 = vector.broadcast %52 : vector<2x1x1xf32> to vector<2x8x32xf32>
    %65 = arith.subf %46, %64 : vector<2x8x32xf32>
    %cst_30 = arith.constant 9.99999974E-6 : f32
    %66 = vector.broadcast %cst_30 : f32 to vector<2x1x1xf32>
    %67 = arith.addf %63, %66 : vector<2x1x1xf32>
    %68 = math.rsqrt %67 : vector<2x1x1xf32>
    %69 = vector.broadcast %68 : vector<2x1x1xf32> to vector<2x8x32xf32>
    %70 = arith.mulf %65, %69 : vector<2x8x32xf32>
    %71 = vector.shape_cast %70 : vector<2x8x32xf32> to vector<16x32xf32>
    %cst_31 = arith.constant dense<0.000000e+00> : vector<16x128xf32>
    %72 = tpu.matmul %71, %0, %cst_31 {dimension_numbers = #tpu.dot_dimension_numbers<[1], [0], [0], [1], [0, 0, 1, 1], [], []>} : vector<16x32xf32>, vector<32x128xf32>, vector<16x128xf32> -> vector<16x128xf32>
    %73 = vector.broadcast %1 : vector<1x128xf32> to vector<16x128xf32>
    %74 = arith.addf %72, %73 : vector<16x128xf32>
    %cst_32 = arith.constant dense<0.000000e+00> : vector<16x64xf32>
    %75 = tpu.matmul %20, %2, %cst_32 {dimension_numbers = #tpu.dot_dimension_numbers<[1], [0], [0], [1], [0, 0, 1, 1], [], []>} : vector<16x32xf32>, vector<32x64xf32>, vector<16x64xf32> -> vector<16x64xf32>
    %76 = vector.broadcast %3 : vector<1x64xf32> to vector<16x64xf32>
    %77 = arith.addf %75, %76 : vector<16x64xf32>
    %78 = vector.extract_strided_slice %74 {offsets = [0, 0], sizes = [16, 32], strides = [1, 1]} : vector<16x128xf32> to vector<16x32xf32>
    %79 = vector.extract_strided_slice %74 {offsets = [0, 32], sizes = [16, 32], strides = [1, 1]} : vector<16x128xf32> to vector<16x32xf32>
    %80 = tpu.concatenate %79, %79, %79, %79 in 0 : vector<16x32xf32>, vector<16x32xf32>, vector<16x32xf32>, vector<16x32xf32> -> vector<64x32xf32>
    %81 = arith.mulf %80, %13 : vector<64x32xf32>
    %82 = tpu.concatenate %77, %77, %77, %77 in 0 : vector<16x64xf32>, vector<16x64xf32>, vector<16x64xf32>, vector<16x64xf32> -> vector<64x64xf32>
    %83 = arith.mulf %82, %11 : vector<64x64xf32>
    %cst_33 = arith.constant dense<0.000000e+00> : vector<16x64xf32>
    %84 = tpu.matmul %78, %81, %cst_33 {dimension_numbers = #tpu.dot_dimension_numbers<[1], [1], [0], [0], [0, 0, 1, 0], [], []>} : vector<16x32xf32>, vector<64x32xf32>, vector<16x64xf32> -> vector<16x64xf32>
    %85 = arith.addf %84, %12 : vector<16x64xf32>
    %cst_34 = arith.constant dense<0xFF800000> : vector<16xf32>
    %86 = vector.multi_reduction <maximumf>, %85, %cst_34 [1] : vector<16x64xf32> to vector<16xf32>
    %87 = vector.shape_cast %86 : vector<16xf32> to vector<16x1xf32>
    %88 = vector.broadcast %87 : vector<16x1xf32> to vector<16x64xf32>
    %89 = arith.subf %85, %88 : vector<16x64xf32>
    %90 = math.exp %89 : vector<16x64xf32>
    %cst_35 = arith.constant dense<0.000000e+00> : vector<16x64xf32>
    %91 = tpu.matmul %90, %83, %cst_35 {dimension_numbers = #tpu.dot_dimension_numbers<[1], [0], [0], [1], [0, 0, 1, 1], [], []>} : vector<16x64xf32>, vector<64x64xf32>, vector<16x64xf32> -> vector<16x64xf32>
    %92 = vector.extract_strided_slice %91 {offsets = [0, 0], sizes = [16, 32], strides = [1, 1]} : vector<16x64xf32> to vector<16x32xf32>
    %93 = vector.extract_strided_slice %91 {offsets = [0, 32], sizes = [16, 32], strides = [1, 1]} : vector<16x64xf32> to vector<16x32xf32>
    %94 = arith.divf %92, %93 : vector<16x32xf32>
    %cst_36 = arith.constant dense<0.000000e+00> : vector<16x32xf32>
    %95 = tpu.matmul %94, %4, %cst_36 {dimension_numbers = #tpu.dot_dimension_numbers<[1], [0], [0], [1], [0, 0, 1, 1], [], []>} : vector<16x32xf32>, vector<32x32xf32>, vector<16x32xf32> -> vector<16x32xf32>
    %96 = vector.broadcast %5 : vector<1x32xf32> to vector<16x32xf32>
    %97 = arith.addf %95, %96 : vector<16x32xf32>
    %98 = arith.addf %71, %97 : vector<16x32xf32>
    %99 = vector.shape_cast %98 : vector<16x32xf32> to vector<2x8x32xf32>
    %cst_37 = arith.constant dense<0.000000e+00> : vector<2x8xf32>
    %100 = vector.multi_reduction <add>, %99, %cst_37 [2] : vector<2x8x32xf32> to vector<2x8xf32>
    %101 = vector.shape_cast %100 : vector<2x8xf32> to vector<2x8x1xf32>
    %cst_38 = arith.constant dense<0.000000e+00> : vector<2x1xf32>
    %102 = vector.multi_reduction <add>, %101, %cst_38 [1] : vector<2x8x1xf32> to vector<2x1xf32>
    %103 = vector.shape_cast %102 : vector<2x1xf32> to vector<2x1x1xf32>
    %cst_39 = arith.constant 3.906250e-03 : f32
    %104 = vector.broadcast %cst_39 : f32 to vector<2x1x1xf32>
    %105 = arith.mulf %103, %104 : vector<2x1x1xf32>
    %106 = arith.mulf %99, %99 : vector<2x8x32xf32>
    %cst_40 = arith.constant dense<0.000000e+00> : vector<2x8xf32>
    %107 = vector.multi_reduction <add>, %106, %cst_40 [2] : vector<2x8x32xf32> to vector<2x8xf32>
    %108 = vector.shape_cast %107 : vector<2x8xf32> to vector<2x8x1xf32>
    %cst_41 = arith.constant dense<0.000000e+00> : vector<2x1xf32>
    %109 = vector.multi_reduction <add>, %108, %cst_41 [1] : vector<2x8x1xf32> to vector<2x1xf32>
    %110 = vector.shape_cast %109 : vector<2x1xf32> to vector<2x1x1xf32>
    %cst_42 = arith.constant 3.906250e-03 : f32
    %111 = vector.broadcast %cst_42 : f32 to vector<2x1x1xf32>
    %112 = arith.mulf %110, %111 : vector<2x1x1xf32>
    %113 = arith.mulf %105, %105 : vector<2x1x1xf32>
    %114 = arith.subf %112, %113 : vector<2x1x1xf32>
    %cst_43 = arith.constant 0.000000e+00 : f32
    %115 = vector.broadcast %cst_43 : f32 to vector<2x1x1xf32>
    %116 = arith.maximumf %114, %115 : vector<2x1x1xf32>
    %117 = vector.broadcast %105 : vector<2x1x1xf32> to vector<2x8x32xf32>
    %118 = arith.subf %99, %117 : vector<2x8x32xf32>
    %cst_44 = arith.constant 9.99999974E-6 : f32
    %119 = vector.broadcast %cst_44 : f32 to vector<2x1x1xf32>
    %120 = arith.addf %116, %119 : vector<2x1x1xf32>
    %121 = math.rsqrt %120 : vector<2x1x1xf32>
    %122 = vector.broadcast %121 : vector<2x1x1xf32> to vector<2x8x32xf32>
    %123 = arith.mulf %118, %122 : vector<2x8x32xf32>
    %124 = vector.shape_cast %123 : vector<2x8x32xf32> to vector<16x32xf32>
    %cst_45 = arith.constant dense<0.000000e+00> : vector<16x64xf32>
    %125 = tpu.matmul %124, %6, %cst_45 {dimension_numbers = #tpu.dot_dimension_numbers<[1], [0], [0], [1], [0, 0, 1, 1], [], []>} : vector<16x32xf32>, vector<32x64xf32>, vector<16x64xf32> -> vector<16x64xf32>
    %126 = vector.broadcast %7 : vector<1x64xf32> to vector<16x64xf32>
    %127 = arith.addf %125, %126 : vector<16x64xf32>
    %cst_46 = arith.constant 0.000000e+00 : f32
    %128 = vector.broadcast %cst_46 : f32 to vector<16x64xf32>
    %129 = arith.maximumf %127, %128 : vector<16x64xf32>
    %cst_47 = arith.constant dense<0.000000e+00> : vector<16x32xf32>
    %130 = tpu.matmul %129, %8, %cst_47 {dimension_numbers = #tpu.dot_dimension_numbers<[1], [1], [0], [0], [0, 0, 1, 0], [], []>} : vector<16x64xf32>, vector<32x64xf32>, vector<16x32xf32> -> vector<16x32xf32>
    %131 = vector.broadcast %9 : vector<1x32xf32> to vector<16x32xf32>
    %132 = arith.addf %130, %131 : vector<16x32xf32>
    %133 = arith.addf %124, %132 : vector<16x32xf32>
    %134 = vector.shape_cast %133 : vector<16x32xf32> to vector<2x8x32xf32>
    %cst_48 = arith.constant dense<0.000000e+00> : vector<2x8xf32>
    %135 = vector.multi_reduction <add>, %134, %cst_48 [2] : vector<2x8x32xf32> to vector<2x8xf32>
    %136 = vector.shape_cast %135 : vector<2x8xf32> to vector<2x8x1xf32>
    %cst_49 = arith.constant dense<0.000000e+00> : vector<2x1xf32>
    %137 = vector.multi_reduction <add>, %136, %cst_49 [1] : vector<2x8x1xf32> to vector<2x1xf32>
    %138 = vector.shape_cast %137 : vector<2x1xf32> to vector<2x1x1xf32>
    %cst_50 = arith.constant 3.906250e-03 : f32
    %139 = vector.broadcast %cst_50 : f32 to vector<2x1x1xf32>
    %140 = arith.mulf %138, %139 : vector<2x1x1xf32>
    %141 = arith.mulf %134, %134 : vector<2x8x32xf32>
    %cst_51 = arith.constant dense<0.000000e+00> : vector<2x8xf32>
    %142 = vector.multi_reduction <add>, %141, %cst_51 [2] : vector<2x8x32xf32> to vector<2x8xf32>
    %143 = vector.shape_cast %142 : vector<2x8xf32> to vector<2x8x1xf32>
    %cst_52 = arith.constant dense<0.000000e+00> : vector<2x1xf32>
    %144 = vector.multi_reduction <add>, %143, %cst_52 [1] : vector<2x8x1xf32> to vector<2x1xf32>
    %145 = vector.shape_cast %144 : vector<2x1xf32> to vector<2x1x1xf32>
    %cst_53 = arith.constant 3.906250e-03 : f32
    %146 = vector.broadcast %cst_53 : f32 to vector<2x1x1xf32>
    %147 = arith.mulf %145, %146 : vector<2x1x1xf32>
    %148 = arith.mulf %140, %140 : vector<2x1x1xf32>
    %149 = arith.subf %147, %148 : vector<2x1x1xf32>
    %cst_54 = arith.constant 0.000000e+00 : f32
    %150 = vector.broadcast %cst_54 : f32 to vector<2x1x1xf32>
    %151 = arith.maximumf %149, %150 : vector<2x1x1xf32>
    %152 = vector.broadcast %140 : vector<2x1x1xf32> to vector<2x8x32xf32>
    %153 = arith.subf %134, %152 : vector<2x8x32xf32>
    %cst_55 = arith.constant 9.99999974E-6 : f32
    %154 = vector.broadcast %cst_55 : f32 to vector<2x1x1xf32>
    %155 = arith.addf %151, %154 : vector<2x1x1xf32>
    %156 = math.rsqrt %155 : vector<2x1x1xf32>
    %157 = vector.broadcast %156 : vector<2x1x1xf32> to vector<2x8x32xf32>
    %158 = arith.mulf %153, %157 : vector<2x8x32xf32>
    %159 = vector.shape_cast %158 : vector<2x8x32xf32> to vector<16x32xf32>
    %160 = vector.shape_cast %159 : vector<16x32xf32> to vector<2x8x32xf32>
    %c0_56 = arith.constant 0 : index
    %c0_57 = arith.constant 0 : index
    %c0_58 = arith.constant 0 : index
    %161 = vector.load %arg4[%c0_56, %c0_57, %c0_58] : memref<2x8x32xf32, #tpu.memory_space<vmem>>, vector<2x8x32xf32>
    tpu.vector_store %arg4[%c0_56, %c0_57, %c0_58], %160 {strides = array<i32>} : memref<2x8x32xf32, #tpu.memory_space<vmem>>, vector<2x8x32xf32>,
    return
  }
  func.func @transform_0(%arg0: i32) -> (i32, i32, i32) {
    %c0_i32 = arith.constant 0 : i32
    %c0_i32_0 = arith.constant 0 : i32
    %c0_i32_1 = arith.constant 0 : i32
    %c0_i32_2 = arith.constant 0 : i32
    return %c0_i32, %c0_i32_0, %c0_i32_1 : i32, i32, i32
  }
  func.func @transform_1(%arg0: i32) -> (i32, i32, i32) {
    %c0_i32 = arith.constant 0 : i32
    %c0_i32_0 = arith.constant 0 : i32
    %c0_i32_1 = arith.constant 0 : i32
    %c0_i32_2 = arith.constant 0 : i32
    return %c0_i32, %c0_i32_0, %c0_i32_1 : i32, i32, i32
  }
  func.func @transform_2(%arg0: i32) -> (i32, i32) {
    %c0_i32 = arith.constant 0 : i32
    %c0_i32_0 = arith.constant 0 : i32
    %c0_i32_1 = arith.constant 0 : i32
    return %c0_i32, %c0_i32_0 : i32, i32
  }
  func.func @transform_3(%arg0: i32) -> (i32, i32, i32) {
    %c0_i32 = arith.constant 0 : i32
    %c0_i32_0 = arith.constant 0 : i32
    %c0_i32_1 = arith.constant 0 : i32
    %c0_i32_2 = arith.constant 0 : i32
    return %c0_i32, %c0_i32_0, %c0_i32_1 : i32, i32, i32
  }
}

</mosaic_0001>

<llo_original>
// kernel: tpu_custom_call.1
$region0: #{tpu_custom_call.1}
  #allocation0 [shape = 'u32[]', space=smem, size = 0x4, offset = 0x4, fixed_abs, tag = 'smem constant byte address 0x4 - core index']
  #allocation1 [shape = 'u32[144,128]{1,0:T(1,128)}', space=vmem, size = 0x12000, scoped, tag = 'internal scratch']
  %s0 = inlined_call_operand.hbm [shape: f32[2,8,32], index: 0, kind: input, shape index: {}]
  %s1 = inlined_call_operand.hbm [shape: f32[2,8,32], index: 1, kind: input, shape index: {}]
  %s2 = inlined_call_operand.hbm [shape: f32[288,128], index: 2, kind: input, shape index: {}]
  %s3 = inlined_call_operand.hbm [shape: f32[2,8,32], index: 3, kind: output, shape index: {}]
  %s4 = sld [smem:[#allocation0]]
  $region34: #{tpu_custom_call.1} parent=0
    _
  %s6 = ssub.s32 1, %s4
  %s7 = scalar_select 0, %s6, %s4
  $region1: #{tpu_custom_call.1} parent=0
    #allocation2 [shape = 'u8[8192]{0}', space=vmem, size = 0x2000, scoped, tag = 'input window, operand 0, single buffered']
    #allocation3 [shape = 's32[1]{0}', space=sflag, size = 0x4, scoped, tag = 'scoped memory for tpu_custom_call.1']
    #allocation4 [shape = 's32[1]{0}', space=sflag, size = 0x4, scoped, tag = 'scoped memory for tpu_custom_call.1']
    #allocation5 [shape = 'u8[8192]{0}', space=vmem, size = 0x2000, scoped, tag = 'input window, operand 1, single buffered']
    #allocation6 [shape = 's32[1]{0}', space=sflag, size = 0x4, scoped, tag = 'scoped memory for tpu_custom_call.1']
    #allocation7 [shape = 'u8[147456]{0}', space=vmem, size = 0x24000, scoped, tag = 'input window, operand 2, single buffered']
    #allocation8 [shape = 'u8[8192]{0}', space=vmem, size = 0x2000, scoped, tag = 'output window, operand 0, single buffered']
    %8 = vsyncpa [#allocation3], 0
    %9 = vsyncpa [#allocation6], 0
    %10 = vsyncpa [#allocation4], 0
    // Predicated region
    $region2: #{tpu_custom_call.1} parent=1 // pred_check
      _
    $region3: #{tpu_custom_call.1} parent=1 // pred_check_branch
      %12 = sbr.rel (0) target = $region5
    $region4: #{tpu_custom_call.1} parent=1 // pred_region
      %s14 = ssub.s32 256, 256
      %15 = vsyncadd [#allocation3], %s14
      %s16 = sshll.u32 [#allocation2], 4
      %s17 = int_to_ptr.vmem [resolvable:$true] %s16
      %22 = dma.hbm_to_vmem [thread:$0]  %s0, 256, %s17, [#allocation3], 128, 128, 8
    $region5: #{tpu_custom_call.1} parent=1 // pred_fallthru
      _
    // Predicated region
    $region6: #{tpu_custom_call.1} parent=1 // pred_check
      _
    $region7: #{tpu_custom_call.1} parent=1 // pred_check_branch
      %24 = sbr.rel (0) target = $region9
    $region8: #{tpu_custom_call.1} parent=1 // pred_region
      %s26 = ssub.s32 256, 256
      %27 = vsyncadd [#allocation6], %s26
      %s28 = sshll.u32 [#allocation5], 4
      %s29 = int_to_ptr.vmem [resolvable:$true] %s28
      %34 = dma.hbm_to_vmem [thread:$0]  %s1, 256, %s29, [#allocation6], 128, 128, 8
    $region9: #{tpu_custom_call.1} parent=1 // pred_fallthru
      _
    // Predicated region
    $region10: #{tpu_custom_call.1} parent=1 // pred_check
      _
    $region11: #{tpu_custom_call.1} parent=1 // pred_check_branch
      %36 = sbr.rel (0) target = $region13
    $region12: #{tpu_custom_call.1} parent=1 // pred_region
      %s38 = ssub.s32 4608, 4608
      %39 = vsyncadd [#allocation6], %s38
      %s40 = sshll.u32 [#allocation7], 4
      %s41 = int_to_ptr.vmem [resolvable:$true] %s40
      %46 = dma.hbm_to_vmem [thread:$0]  %s2, 4608, %s41, [#allocation6], 128, 128, 8
    $region13: #{tpu_custom_call.1} parent=1 // pred_fallthru
      _
    // Predicated region
    $region14: #{tpu_custom_call.1} parent=1 // pred_check
      _
    $region15: #{tpu_custom_call.1} parent=1 // pred_check_branch
      %48 = sbr.rel (0) target = $region17
    $region16: #{tpu_custom_call.1} parent=1 // pred_region
      %49 = dma.done [#allocation3], 256
    $region17: #{tpu_custom_call.1} parent=1 // pred_fallthru
      _
    // Predicated region
    $region18: #{tpu_custom_call.1} parent=1 // pred_check
      _
    $region19: #{tpu_custom_call.1} parent=1 // pred_check_branch
      %51 = sbr.rel (0) target = $region21
    $region20: #{tpu_custom_call.1} parent=1 // pred_region
      %52 = dma.done [#allocation6], 256
    $region21: #{tpu_custom_call.1} parent=1 // pred_fallthru
      _
    // Predicated region
    $region22: #{tpu_custom_call.1} parent=1 // pred_check
      _
    $region23: #{tpu_custom_call.1} parent=1 // pred_check_branch
      %54 = sbr.rel (0) target = $region25
    $region24: #{tpu_custom_call.1} parent=1 // pred_region
      %55 = dma.done [#allocation6], 4608
    $region25: #{tpu_custom_call.1} parent=1 // pred_fallthru
      _
    %v56 = vld [vmem:[#allocation7] sm:$0xff]
    %v57 = vld [vmem:[#allocation7 + $0x8] sm:$0xff]
    %v58 = vld [vmem:[#allocation7 + $0x10] sm:$0xff]
    %v59 = vld [vmem:[#allocation7 + $0x18] sm:$0xff]
    %v60 = vld [vmem:[#allocation7 + $0xa0] sm:$0x1]
    %v61 = vld [vmem:[#allocation7 + $0x20] sm:$0xff]
    %v62 = vld [vmem:[#allocation7 + $0x28] sm:$0xff]
    %v63 = vld [vmem:[#allocation7 + $0x30] sm:$0xff]
    %v64 = vld [vmem:[#allocation7 + $0x38] sm:$0xff]
    %v65 = vld [vmem:[#allocation7 + $0xa8] sm:$0x1]
    %v66 = vld [vmem:[#allocation7 + $0x40] sm:$0xff]
    %v67 = vld [vmem:[#allocation7 + $0x48] sm:$0xff]
    %v68 = vld [vmem:[#allocation7 + $0x50] sm:$0xff]
    %v69 = vld [vmem:[#allocation7 + $0x58] sm:$0xff]
    %v70 = vld [vmem:[#allocation7 + $0xb0] sm:$0x1]
    %v71 = vld [vmem:[#allocation7 + $0x60] sm:$0xff]
    %v72 = vld [vmem:[#allocation7 + $0x68] sm:$0xff]
    %v73 = vld [vmem:[#allocation7 + $0x70] sm:$0xff]
    %v74 = vld [vmem:[#allocation7 + $0x78] sm:$0xff]
    %v75 = vld [vmem:[#allocation7 + $0xb8] sm:$0x1]
    %v76 = vld [vmem:[#allocation7 + $0x80] sm:$0xff]
    %v77 = vld [vmem:[#allocation7 + $0x88] sm:$0xff]
    %v78 = vld [vmem:[#allocation7 + $0x90] sm:$0xff]
    %v79 = vld [vmem:[#allocation7 + $0x98] sm:$0xff]
    %v80 = vld [vmem:[#allocation7 + $0xc0] sm:$0x1]
    %v81 = vld [vmem:[#allocation7 + $0xc8] sm:$0xff]
    %v82 = vld [vmem:[#allocation7 + $0xd0] sm:$0xff]
    %v83 = vld [vmem:[#allocation7 + $0xd8] sm:$0xff]
    %v84 = vld [vmem:[#allocation7 + $0xe0] sm:$0xff]
    %v85 = vld [vmem:[#allocation7 + $0xe8] sm:$0xff]
    %v86 = vld [vmem:[#allocation7 + $0xf0] sm:$0xff]
    %v87 = vld [vmem:[#allocation7 + $0xf8] sm:$0xff]
    %v88 = vld [vmem:[#allocation7 + $0x100] sm:$0xff]
    %v89 = vld [vmem:[#allocation7 + $0x108] sm:$0xff]
    %v90 = vld [vmem:[#allocation7 + $0x110] sm:$0xff]
    %v91 = vld [vmem:[#allocation7 + $0x118] sm:$0xff]
    %v92 = vld [vmem:[#allocation2] sm:$0xff]
    %v93 = vld [vmem:[#allocation2 + $0x8] sm:$0xff]
    %v94 = vadd.f32 %v92, %v81
    %v95 = vadd.f32 %v93, %v81
    %v96 = vld [vmem:[#allocation5] sm:$0xff]
    %v97 = vld [vmem:[#allocation5 + $0x8] sm:$0xff]
    %v98 = vlaneseq
    %v99 = vshrl.u32 %v98, 7
    %v100 = vsub.s32 0, %v99
    %v101 = vrot.slane %v60, %v100
    %vm102 = vcmask 261120
    %v104 = vsel %vm102, %v94, 0
    %v107 = vsel %vm102, %v95, 0
    %109 = vmatprep.subr.mxu0 0.0
    %110 = vmatpush1.msra.mxu0 %v56
    %111 = vmatprep.subr.mxu0 0.0
    %112 = vmatpush1.msra.mxu0 %v57
    %113 = vmatprep.subr.mxu0 0.0
    %114 = vmatpush1.msra.mxu0 %v58
    %115 = vmatprep.subr.mxu0 0.0
    %116 = vmatpush1.msra.mxu0 %v59
    %117 = vmatprep.subr.mxu0 0.0
    %118 = vmatpush1.msra.mxu0 0.0
    %119 = vmatprep.subr.mxu0 0.0
    %120 = vmatpush1.msra.mxu0 0.0
    %121 = vmatprep.subr.mxu0 0.0
    %122 = vmatpush1.msra.mxu0 0.0
    %123 = vmatprep.subr.mxu0 0.0
    %124 = vmatpush1.msra.mxu0 0.0
    %125 = vmatprep.subr.mxu0 0.0
    %126 = vmatpush1.msra.mxu0 0.0
    %127 = vmatprep.subr.mxu0 0.0
    %128 = vmatpush1.msra.mxu0 0.0
    %129 = vmatprep.subr.mxu0 0.0
    %130 = vmatpush1.msra.mxu0 0.0
    %131 = vmatprep.subr.mxu0 0.0
    %132 = vmatpush1.msra.mxu0 0.0
    %133 = vmatprep.subr.mxu0 0.0
    %134 = vmatpush1.msra.mxu0 0.0
    %135 = vmatprep.subr.mxu0 0.0
    %136 = vmatpush1.msra.mxu0 0.0
    %137 = vmatprep.subr.mxu0 0.0
    %138 = vmatpush1.msra.mxu0 0.0
    %139 = vmatprep.subr.mxu0 0.0
    %140 = vmatpush1.msra.mxu0 0.0
    %141 = vmatprep.subr.mxu0 0.0
    %142 = vmatpush1.msra.mxu0 0.0
    %143 = vmatprep.subr.mxu0 0.0
    %144 = vmatpush1.msra.mxu0 0.0
    %145 = vmatprep.subr.mxu0 0.0
    %146 = vmatpush1.msra.mxu0 0.0
    %147 = vmatprep.subr.mxu0 0.0
    %148 = vmatpush1.msra.mxu0 0.0
    %149 = vmatprep.subr.mxu0 0.0
    %150 = vmatpush1.msra.mxu0 0.0
    %151 = vmatprep.subr.mxu0 0.0
    %152 = vmatpush1.msra.mxu0 0.0
    %153 = vmatprep.subr.mxu0 0.0
    %154 = vmatpush1.msra.mxu0 0.0
    %155 = vmatprep.subr.mxu0 0.0
    %156 = vmatpush1.msra.mxu0 0.0
    %157 = vmatprep.subr.mxu0 0.0
    %158 = vmatpush1.msra.mxu0 0.0
    %159 = vmatprep.subr.mxu0 0.0
    %160 = vmatpush1.msra.mxu0 0.0
    %161 = vmatprep.subr.mxu0 0.0
    %162 = vmatpush1.msra.mxu0 0.0
    %163 = vmatprep.subr.mxu0 0.0
    %164 = vmatpush1.msra.mxu0 0.0
    %165 = vmatprep.subr.mxu0 0.0
    %166 = vmatpush1.msra.mxu0 0.0
    %167 = vmatprep.subr.mxu0 0.0
    %168 = vmatpush1.msra.mxu0 0.0
    %169 = vmatprep.subr.mxu0 0.0
    %170 = vmatpush1.msra.mxu0 0.0
    %171 = vmatprep.subr.mxu0 0.0
    %172 = vmatpush1.msra.mxu0 0.0
    %173 = vmatprep.mubr.f32.mxu0 0.0
    %174 = vmatmul.mubr.f32.gmra.mrb[0].mxu0 %v104
    %v175 = vpop.f32.mrb[0].mxu0
    %v176 = vadd.f32 %v101, %v175
    %v177 = vpop.f32.mrb[0].mxu0
    %178 = vmatprep.mubr.f32.mxu0 0.0
    %179 = vmatmul.mubr.f32.gmra.mrb[0].mxu0 %v107
    %v180 = vpop.f32.mrb[0].mxu0
    %v181 = vadd.f32 %v101, %v180
    %v182 = vpop.f32.mrb[0].mxu0
    %183 = vdwg.mxu0
    %192 = vrot.lane.b32.xlu0 %v82, 32
    %v193 = vpop.permute.xlu0 %192
    %194 = vrot.lane.b32.xlu0 %v83, 32
    %v195 = vpop.permute.xlu0 %194
    %196 = vrot.lane.b32.xlu0 %v84, 32
    %v197 = vpop.permute.xlu0 %196
    %198 = vrot.lane.b32.xlu0 %v85, 32
    %v199 = vpop.permute.xlu0 %198
    %200 = vrot.lane.b32.xlu0 %v86, 32
    %v201 = vpop.permute.xlu0 %200
    %202 = vrot.lane.b32.xlu0 %v87, 32
    %v203 = vpop.permute.xlu0 %202
    %204 = vrot.lane.b32.xlu0 %v88, 32
    %v205 = vpop.permute.xlu0 %204
    %206 = vrot.lane.b32.xlu0 %v89, 32
    %v207 = vpop.permute.xlu0 %206
    %v216 = vmul.f32 %v176, %v193
    %v217 = vmul.f32 %v181, %v195
    %v218 = vmul.f32 %v176, %v197
    %v219 = vmul.f32 %v181, %v199
    %v220 = vmul.f32 %v176, %v201
    %v221 = vmul.f32 %v181, %v203
    %v222 = vmul.f32 %v176, %v205
    %v223 = vmul.f32 %v181, %v207
    %224 = vrot.lane.b32.xlu0 %v82, 64
    %v225 = vpop.permute.xlu0 %224
    %226 = vrot.lane.b32.xlu0 %v83, 64
    %v227 = vpop.permute.xlu0 %226
    %228 = vrot.lane.b32.xlu0 %v84, 64
    %v229 = vpop.permute.xlu0 %228
    %230 = vrot.lane.b32.xlu0 %v85, 64
    %v231 = vpop.permute.xlu0 %230
    %232 = vrot.lane.b32.xlu0 %v86, 64
    %v233 = vpop.permute.xlu0 %232
    %234 = vrot.lane.b32.xlu0 %v87, 64
    %v235 = vpop.permute.xlu0 %234
    %236 = vrot.lane.b32.xlu0 %v88, 64
    %v237 = vpop.permute.xlu0 %236
    %238 = vrot.lane.b32.xlu0 %v89, 64
    %v239 = vpop.permute.xlu0 %238
    %v248 = vmul.f32 %v176, %v225
    %v249 = vmul.f32 %v181, %v227
    %v250 = vmul.f32 %v176, %v229
    %v251 = vmul.f32 %v181, %v231
    %v252 = vmul.f32 %v176, %v233
    %v253 = vmul.f32 %v181, %v235
    %v254 = vmul.f32 %v176, %v237
    %v255 = vmul.f32 %v181, %v239
    %264 = vrot.lane.b32.xlu0 %v216, 96
    %v265 = vpop.permute.xlu0 %264
    %266 = vrot.lane.b32.xlu0 %v217, 96
    %v267 = vpop.permute.xlu0 %266
    %268 = vrot.lane.b32.xlu0 %v218, 96
    %v269 = vpop.permute.xlu0 %268
    %270 = vrot.lane.b32.xlu0 %v219, 96
    %v271 = vpop.permute.xlu0 %270
    %272 = vrot.lane.b32.xlu0 %v220, 96
    %v273 = vpop.permute.xlu0 %272
    %274 = vrot.lane.b32.xlu0 %v221, 96
    %v275 = vpop.permute.xlu0 %274
    %276 = vrot.lane.b32.xlu0 %v222, 96
    %v277 = vpop.permute.xlu0 %276
    %278 = vrot.lane.b32.xlu0 %v223, 96
    %v279 = vpop.permute.xlu0 %278
    %v281 = vsel %vm102, %v176, 0
    %v284 = vsel %vm102, %v181, 0
    %v286 = vsel %vm102, %v265, 0
    %v288 = vsel %vm102, %v267, 0
    %v290 = vsel %vm102, %v269, 0
    %v292 = vsel %vm102, %v271, 0
    %v294 = vsel %vm102, %v273, 0
    %v296 = vsel %vm102, %v275, 0
    %v298 = vsel %vm102, %v277, 0
    %v300 = vsel %vm102, %v279, 0
    %302 = vmatprep.subr.mxu0 0.0
    %303 = vmatpush1.xpose.msra.mxu0 %v286
    %304 = vmatprep.subr.mxu0 0.0
    %305 = vmatpush1.xpose.msra.mxu0 %v288
    %306 = vmatprep.subr.mxu0 0.0
    %307 = vmatpush1.xpose.msra.mxu0 %v290
    %308 = vmatprep.subr.mxu0 0.0
    %309 = vmatpush1.xpose.msra.mxu0 %v292
    %310 = vmatprep.subr.mxu0 0.0
    %311 = vmatpush1.xpose.msra.mxu0 %v294
    %312 = vmatprep.subr.mxu0 0.0
    %313 = vmatpush1.xpose.msra.mxu0 %v296
    %314 = vmatprep.subr.mxu0 0.0
    %315 = vmatpush1.xpose.msra.mxu0 %v298
    %316 = vmatprep.subr.mxu0 0.0
    %317 = vmatpush1.xpose.msra.mxu0 %v300
    %318 = vmatprep.subr.mxu0 0.0
    %319 = vmatpush1.xpose.msra.mxu0 0.0
    %320 = vmatprep.subr.mxu0 0.0
    %321 = vmatpush1.xpose.msra.mxu0 0.0
    %322 = vmatprep.subr.mxu0 0.0
    %323 = vmatpush1.xpose.msra.mxu0 0.0
    %324 = vmatprep.subr.mxu0 0.0
    %325 = vmatpush1.xpose.msra.mxu0 0.0
    %326 = vmatprep.subr.mxu0 0.0
    %327 = vmatpush1.xpose.msra.mxu0 0.0
    %328 = vmatprep.subr.mxu0 0.0
    %329 = vmatpush1.xpose.msra.mxu0 0.0
    %330 = vmatprep.subr.mxu0 0.0
    %331 = vmatpush1.xpose.msra.mxu0 0.0
    %332 = vmatprep.subr.mxu0 0.0
    %333 = vmatpush1.xpose.msra.mxu0 0.0
    %334 = vmatprep.subr.mxu0 0.0
    %335 = vmatpush1.xpose.msra.mxu0 0.0
    %336 = vmatprep.subr.mxu0 0.0
    %337 = vmatpush1.xpose.msra.mxu0 0.0
    %338 = vmatprep.subr.mxu0 0.0
    %339 = vmatpush1.xpose.msra.mxu0 0.0
    %340 = vmatprep.subr.mxu0 0.0
    %341 = vmatpush1.xpose.msra.mxu0 0.0
    %342 = vmatprep.subr.mxu0 0.0
    %343 = vmatpush1.xpose.msra.mxu0 0.0
    %344 = vmatprep.subr.mxu0 0.0
    %345 = vmatpush1.xpose.msra.mxu0 0.0
    %346 = vmatprep.subr.mxu0 0.0
    %347 = vmatpush1.xpose.msra.mxu0 0.0
    %348 = vmatprep.subr.mxu0 0.0
    %349 = vmatpush1.xpose.msra.mxu0 0.0
    %350 = vmatprep.subr.mxu0 0.0
    %351 = vmatpush1.xpose.msra.mxu0 0.0
    %352 = vmatprep.subr.mxu0 0.0
    %353 = vmatpush1.xpose.msra.mxu0 0.0
    %354 = vmatprep.subr.mxu0 0.0
    %355 = vmatpush1.xpose.msra.mxu0 0.0
    %356 = vmatprep.subr.mxu0 0.0
    %357 = vmatpush1.xpose.msra.mxu0 0.0
    %358 = vmatprep.subr.mxu0 0.0
    %359 = vmatpush1.xpose.msra.mxu0 0.0
    %360 = vmatprep.subr.mxu0 0.0
    %361 = vmatpush1.xpose.msra.mxu0 0.0
    %362 = vmatprep.subr.mxu0 0.0
    %363 = vmatpush1.xpose.msra.mxu0 0.0
    %364 = vmatprep.subr.mxu0 0.0
    %365 = vmatpush1.xpose.msra.mxu0 0.0
    %366 = vmatprep.mubr.f32.mxu0 0.0
    %367 = vmatmul.mubr.f32.gmra.mrb[0].mxu0 %v281
    %v368 = vpop.f32.mrb[0].mxu0
    %v369 = vadd.f32 %v90, %v368
    %v370 = vpop.f32.mrb[0].mxu0
    %371 = vmatprep.mubr.f32.mxu0 0.0
    %372 = vmatmul.mubr.f32.gmra.mrb[0].mxu0 %v284
    %v373 = vpop.f32.mrb[0].mxu0
    %v374 = vadd.f32 %v91, %v373
    %v375 = vpop.f32.mrb[0].mxu0
    %376 = vdwg.mxu0
    %vm377 = vcmask 523264
    %v378 = vsel %vm377, %v369, -inf
    %379 = vmax.xlane.f32.xlu0 %v378
    %v380 = vpop.xlane.xlu0 %379
    %v381 = vsel %vm377, %v374, -inf
    %382 = vmax.xlane.f32.xlu0 %v381
    %v383 = vpop.xlane.xlu0 %382
    %v384 = vsub.f32 %v369, %v380
    %v385 = vsub.f32 %v374, %v383
    %v386 = vmul.f32 %v384, 1.442695
    %v387 = vpow.pop %v386
    %v388 = vmul.f32 %v385, 1.442695
    %v389 = vpow.pop %v388
    %398 = vrot.lane.b32.xlu0 %v248, 64
    %v399 = vpop.permute.xlu0 %398
    %400 = vrot.lane.b32.xlu0 %v249, 64
    %v401 = vpop.permute.xlu0 %400
    %402 = vrot.lane.b32.xlu0 %v250, 64
    %v403 = vpop.permute.xlu0 %402
    %404 = vrot.lane.b32.xlu0 %v251, 64
    %v405 = vpop.permute.xlu0 %404
    %406 = vrot.lane.b32.xlu0 %v252, 64
    %v407 = vpop.permute.xlu0 %406
    %408 = vrot.lane.b32.xlu0 %v253, 64
    %v409 = vpop.permute.xlu0 %408
    %410 = vrot.lane.b32.xlu0 %v254, 64
    %v411 = vpop.permute.xlu0 %410
    %412 = vrot.lane.b32.xlu0 %v255, 64
    %v413 = vpop.permute.xlu0 %412
    %v423 = vsel %vm377, %v387, 0
    %v426 = vsel %vm377, %v389, 0
    %428 = vmatprep.subr.mxu0 0.0
    %429 = vmatpush1.msra.mxu0 %v399
    %430 = vmatprep.subr.mxu0 0.0
    %431 = vmatpush1.msra.mxu0 %v401
    %432 = vmatprep.subr.mxu0 0.0
    %433 = vmatpush1.msra.mxu0 %v403
    %434 = vmatprep.subr.mxu0 0.0
    %435 = vmatpush1.msra.mxu0 %v405
    %436 = vmatprep.subr.mxu0 0.0
    %437 = vmatpush1.msra.mxu0 %v407
    %438 = vmatprep.subr.mxu0 0.0
    %439 = vmatpush1.msra.mxu0 %v409
    %440 = vmatprep.subr.mxu0 0.0
    %441 = vmatpush1.msra.mxu0 %v411
    %442 = vmatprep.subr.mxu0 0.0
    %443 = vmatpush1.msra.mxu0 %v413
    %444 = vmatprep.subr.mxu0 0.0
    %445 = vmatpush1.msra.mxu0 0.0
    %446 = vmatprep.subr.mxu0 0.0
    %447 = vmatpush1.msra.mxu0 0.0
    %448 = vmatprep.subr.mxu0 0.0
    %449 = vmatpush1.msra.mxu0 0.0
    %450 = vmatprep.subr.mxu0 0.0
    %451 = vmatpush1.msra.mxu0 0.0
    %452 = vmatprep.subr.mxu0 0.0
    %453 = vmatpush1.msra.mxu0 0.0
    %454 = vmatprep.subr.mxu0 0.0
    %455 = vmatpush1.msra.mxu0 0.0
    %456 = vmatprep.subr.mxu0 0.0
    %457 = vmatpush1.msra.mxu0 0.0
    %458 = vmatprep.subr.mxu0 0.0
    %459 = vmatpush1.msra.mxu0 0.0
    %460 = vmatprep.subr.mxu0 0.0
    %461 = vmatpush1.msra.mxu0 0.0
    %462 = vmatprep.subr.mxu0 0.0
    %463 = vmatpush1.msra.mxu0 0.0
    %464 = vmatprep.subr.mxu0 0.0
    %465 = vmatpush1.msra.mxu0 0.0
    %466 = vmatprep.subr.mxu0 0.0
    %467 = vmatpush1.msra.mxu0 0.0
    %468 = vmatprep.subr.mxu0 0.0
    %469 = vmatpush1.msra.mxu0 0.0
    %470 = vmatprep.subr.mxu0 0.0
    %471 = vmatpush1.msra.mxu0 0.0
    %472 = vmatprep.subr.mxu0 0.0
    %473 = vmatpush1.msra.mxu0 0.0
    %474 = vmatprep.subr.mxu0 0.0
    %475 = vmatpush1.msra.mxu0 0.0
    %476 = vmatprep.subr.mxu0 0.0
    %477 = vmatpush1.msra.mxu0 0.0
    %478 = vmatprep.subr.mxu0 0.0
    %479 = vmatpush1.msra.mxu0 0.0
    %480 = vmatprep.subr.mxu0 0.0
    %481 = vmatpush1.msra.mxu0 0.0
    %482 = vmatprep.subr.mxu0 0.0
    %483 = vmatpush1.msra.mxu0 0.0
    %484 = vmatprep.subr.mxu0 0.0
    %485 = vmatpush1.msra.mxu0 0.0
    %486 = vmatprep.subr.mxu0 0.0
    %487 = vmatpush1.msra.mxu0 0.0
    %488 = vmatprep.subr.mxu0 0.0
    %489 = vmatpush1.msra.mxu0 0.0
    %490 = vmatprep.subr.mxu0 0.0
    %491 = vmatpush1.msra.mxu0 0.0
    %492 = vmatprep.mubr.f32.mxu0 0.0
    %493 = vmatmul.mubr.f32.gmra.mrb[0].mxu0 %v423
    %v494 = vpop.f32.mrb[0].mxu0
    %v495 = vadd.f32 0.0, %v494
    %v496 = vpop.f32.mrb[0].mxu0
    %497 = vmatprep.mubr.f32.mxu0 0.0
    %498 = vmatmul.mubr.f32.gmra.mrb[0].mxu0 %v426
    %v499 = vpop.f32.mrb[0].mxu0
    %v500 = vadd.f32 0.0, %v499
    %v501 = vpop.f32.mrb[0].mxu0
    %502 = vdwg.mxu0
    %505 = vrot.lane.b32.xlu0 %v495, 96
    %v506 = vpop.permute.xlu0 %505
    %507 = vrot.lane.b32.xlu0 %v500, 96
    %v508 = vpop.permute.xlu0 %507
    %v511 = vrcp.pop %v506
    %v512 = vmul.f32 %v495, %v511
    %v513 = vrcp.pop %v508
    %v514 = vmul.f32 %v500, %v513
    %v515 = vlaneseq
    %v516 = vshrl.u32 %v515, 7
    %v517 = vsub.s32 0, %v516
    %v518 = vrot.slane %v70, %v517
    %v520 = vsel %vm102, %v512, 0
    %v523 = vsel %vm102, %v514, 0
    %525 = vmatprep.subr.mxu0 0.0
    %526 = vmatpush1.msra.mxu0 %v66
    %527 = vmatprep.subr.mxu0 0.0
    %528 = vmatpush1.msra.mxu0 %v67
    %529 = vmatprep.subr.mxu0 0.0
    %530 = vmatpush1.msra.mxu0 %v68
    %531 = vmatprep.subr.mxu0 0.0
    %532 = vmatpush1.msra.mxu0 %v69
    %533 = vmatprep.subr.mxu0 0.0
    %534 = vmatpush1.msra.mxu0 0.0
    %535 = vmatprep.subr.mxu0 0.0
    %536 = vmatpush1.msra.mxu0 0.0
    %537 = vmatprep.subr.mxu0 0.0
    %538 = vmatpush1.msra.mxu0 0.0
    %539 = vmatprep.subr.mxu0 0.0
    %540 = vmatpush1.msra.mxu0 0.0
    %541 = vmatprep.subr.mxu0 0.0
    %542 = vmatpush1.msra.mxu0 0.0
    %543 = vmatprep.subr.mxu0 0.0
    %544 = vmatpush1.msra.mxu0 0.0
    %545 = vmatprep.subr.mxu0 0.0
    %546 = vmatpush1.msra.mxu0 0.0
    %547 = vmatprep.subr.mxu0 0.0
    %548 = vmatpush1.msra.mxu0 0.0
    %549 = vmatprep.subr.mxu0 0.0
    %550 = vmatpush1.msra.mxu0 0.0
    %551 = vmatprep.subr.mxu0 0.0
    %552 = vmatpush1.msra.mxu0 0.0
    %553 = vmatprep.subr.mxu0 0.0
    %554 = vmatpush1.msra.mxu0 0.0
    %555 = vmatprep.subr.mxu0 0.0
    %556 = vmatpush1.msra.mxu0 0.0
    %557 = vmatprep.subr.mxu0 0.0
    %558 = vmatpush1.msra.mxu0 0.0
    %559 = vmatprep.subr.mxu0 0.0
    %560 = vmatpush1.msra.mxu0 0.0
    %561 = vmatprep.subr.mxu0 0.0
    %562 = vmatpush1.msra.mxu0 0.0
    %563 = vmatprep.subr.mxu0 0.0
    %564 = vmatpush1.msra.mxu0 0.0
    %565 = vmatprep.subr.mxu0 0.0
    %566 = vmatpush1.msra.mxu0 0.0
    %567 = vmatprep.subr.mxu0 0.0
    %568 = vmatpush1.msra.mxu0 0.0
    %569 = vmatprep.subr.mxu0 0.0
    %570 = vmatpush1.msra.mxu0 0.0
    %571 = vmatprep.subr.mxu0 0.0
    %572 = vmatpush1.msra.mxu0 0.0
    %573 = vmatprep.subr.mxu0 0.0
    %574 = vmatpush1.msra.mxu0 0.0
    %575 = vmatprep.subr.mxu0 0.0
    %576 = vmatpush1.msra.mxu0 0.0
    %577 = vmatprep.subr.mxu0 0.0
    %578 = vmatpush1.msra.mxu0 0.0
    %579 = vmatprep.subr.mxu0 0.0
    %580 = vmatpush1.msra.mxu0 0.0
    %581 = vmatprep.subr.mxu0 0.0
    %582 = vmatpush1.msra.mxu0 0.0
    %583 = vmatprep.subr.mxu0 0.0
    %584 = vmatpush1.msra.mxu0 0.0
    %585 = vmatprep.subr.mxu0 0.0
    %586 = vmatpush1.msra.mxu0 0.0
    %587 = vmatprep.subr.mxu0 0.0
    %588 = vmatpush1.msra.mxu0 0.0
    %589 = vmatprep.mubr.f32.mxu0 0.0
    %590 = vmatmul.mubr.f32.gmra.mrb[0].mxu0 %v520
    %v591 = vpop.f32.mrb[0].mxu0
    %v592 = vadd.f32 %v518, %v591
    %v593 = vpop.f32.mrb[0].mxu0
    %594 = vmatprep.mubr.f32.mxu0 0.0
    %595 = vmatmul.mubr.f32.gmra.mrb[0].mxu0 %v523
    %v596 = vpop.f32.mrb[0].mxu0
    %v597 = vadd.f32 %v518, %v596
    %v598 = vpop.f32.mrb[0].mxu0
    %599 = vdwg.mxu0
    %v600 = vadd.f32 %v94, %v592
    %v601 = vadd.f32 %v95, %v597
    %v602 = vsel %vm102, %v600, 0.0
    %603 = vadd.xlane.f32.xlu0 %v602
    %v604 = vpop.xlane.xlu0 %603
    %v605 = vsel %vm102, %v601, 0.0
    %606 = vadd.xlane.f32.xlu0 %v605
    %v607 = vpop.xlane.xlu0 %606
    %v608 = vrot.slane %v604, 4
    %v609 = vadd.f32 %v604, %v608
    %v610 = vrot.slane %v609, 2
    %v611 = vadd.f32 %v609, %v610
    %v612 = vrot.slane %v611, 1
    %v613 = vadd.f32 %v611, %v612
    %v614 = vrot.slane %v607, 4
    %v615 = vadd.f32 %v607, %v614
    %v616 = vrot.slane %v615, 2
    %v617 = vadd.f32 %v615, %v616
    %v618 = vrot.slane %v617, 1
    %v619 = vadd.f32 %v617, %v618
    %v620 = vmul.f32 %v613, 0.00390625
    %v621 = vmul.f32 %v619, 0.00390625
    %v622 = vmul.f32 %v600, %v600
    %v623 = vmul.f32 %v601, %v601
    %v624 = vsel %vm102, %v622, 0.0
    %625 = vadd.xlane.f32.xlu0 %v624
    %v626 = vpop.xlane.xlu0 %625
    %v627 = vsel %vm102, %v623, 0.0
    %628 = vadd.xlane.f32.xlu0 %v627
    %v629 = vpop.xlane.xlu0 %628
    %v630 = vrot.slane %v626, 4
    %v631 = vadd.f32 %v626, %v630
    %v632 = vrot.slane %v631, 2
    %v633 = vadd.f32 %v631, %v632
    %v634 = vrot.slane %v633, 1
    %v635 = vadd.f32 %v633, %v634
    %v636 = vrot.slane %v629, 4
    %v637 = vadd.f32 %v629, %v636
    %v638 = vrot.slane %v637, 2
    %v639 = vadd.f32 %v637, %v638
    %v640 = vrot.slane %v639, 1
    %v641 = vadd.f32 %v639, %v640
    %v642 = vmul.f32 %v635, 0.00390625
    %v643 = vmul.f32 %v641, 0.00390625
    %v644 = vmul.f32 %v620, %v620
    %v645 = vmul.f32 %v621, %v621
    %v646 = vsub.f32 %v642, %v644
    %v647 = vsub.f32 %v643, %v645
    %v648 = vmax.f32 %v646, 0.0
    %v649 = vmax.f32 %v647, 0.0
    %v650 = vsub.f32 %v600, %v620
    %v651 = vsub.f32 %v601, %v621
    %v652 = vadd.f32 %v648, 1e-05
    %v653 = vadd.f32 %v649, 1e-05
    %v654 = vrsqrt.pop %v652
    %v655 = vrsqrt.pop %v653
    %v656 = vmul.f32 %v650, %v654
    %v657 = vmul.f32 %v651, %v655
    %v659 = vsel %vm102, %v656, 0
    %v662 = vsel %vm102, %v657, 0
    %664 = vmatprep.subr.mxu0 0.0
    %665 = vmatpush1.msra.mxu0 %v56
    %666 = vmatprep.subr.mxu0 0.0
    %667 = vmatpush1.msra.mxu0 %v57
    %668 = vmatprep.subr.mxu0 0.0
    %669 = vmatpush1.msra.mxu0 %v58
    %670 = vmatprep.subr.mxu0 0.0
    %671 = vmatpush1.msra.mxu0 %v59
    %672 = vmatprep.subr.mxu0 0.0
    %673 = vmatpush1.msra.mxu0 0.0
    %674 = vmatprep.subr.mxu0 0.0
    %675 = vmatpush1.msra.mxu0 0.0
    %676 = vmatprep.subr.mxu0 0.0
    %677 = vmatpush1.msra.mxu0 0.0
    %678 = vmatprep.subr.mxu0 0.0
    %679 = vmatpush1.msra.mxu0 0.0
    %680 = vmatprep.subr.mxu0 0.0
    %681 = vmatpush1.msra.mxu0 0.0
    %682 = vmatprep.subr.mxu0 0.0
    %683 = vmatpush1.msra.mxu0 0.0
    %684 = vmatprep.subr.mxu0 0.0
    %685 = vmatpush1.msra.mxu0 0.0
    %686 = vmatprep.subr.mxu0 0.0
    %687 = vmatpush1.msra.mxu0 0.0
    %688 = vmatprep.subr.mxu0 0.0
    %689 = vmatpush1.msra.mxu0 0.0
    %690 = vmatprep.subr.mxu0 0.0
    %691 = vmatpush1.msra.mxu0 0.0
    %692 = vmatprep.subr.mxu0 0.0
    %693 = vmatpush1.msra.mxu0 0.0
    %694 = vmatprep.subr.mxu0 0.0
    %695 = vmatpush1.msra.mxu0 0.0
    %696 = vmatprep.subr.mxu0 0.0
    %697 = vmatpush1.msra.mxu0 0.0
    %698 = vmatprep.subr.mxu0 0.0
    %699 = vmatpush1.msra.mxu0 0.0
    %700 = vmatprep.subr.mxu0 0.0
    %701 = vmatpush1.msra.mxu0 0.0
    %702 = vmatprep.subr.mxu0 0.0
    %703 = vmatpush1.msra.mxu0 0.0
    %704 = vmatprep.subr.mxu0 0.0
    %705 = vmatpush1.msra.mxu0 0.0
    %706 = vmatprep.subr.mxu0 0.0
    %707 = vmatpush1.msra.mxu0 0.0
    %708 = vmatprep.subr.mxu0 0.0
    %709 = vmatpush1.msra.mxu0 0.0
    %710 = vmatprep.subr.mxu0 0.0
    %711 = vmatpush1.msra.mxu0 0.0
    %712 = vmatprep.subr.mxu0 0.0
    %713 = vmatpush1.msra.mxu0 0.0
    %714 = vmatprep.subr.mxu0 0.0
    %715 = vmatpush1.msra.mxu0 0.0
    %716 = vmatprep.subr.mxu0 0.0
    %717 = vmatpush1.msra.mxu0 0.0
    %718 = vmatprep.subr.mxu0 0.0
    %719 = vmatpush1.msra.mxu0 0.0
    %720 = vmatprep.subr.mxu0 0.0
    %721 = vmatpush1.msra.mxu0 0.0
    %722 = vmatprep.subr.mxu0 0.0
    %723 = vmatpush1.msra.mxu0 0.0
    %724 = vmatprep.subr.mxu0 0.0
    %725 = vmatpush1.msra.mxu0 0.0
    %726 = vmatprep.subr.mxu0 0.0
    %727 = vmatpush1.msra.mxu0 0.0
    %728 = vmatprep.mubr.f32.mxu0 0.0
    %729 = vmatmul.mubr.f32.gmra.mrb[0].mxu0 %v659
    %v730 = vpop.f32.mrb[0].mxu0
    %v731 = vadd.f32 %v101, %v730
    %v732 = vpop.f32.mrb[0].mxu0
    %733 = vmatprep.mubr.f32.mxu0 0.0
    %734 = vmatmul.mubr.f32.gmra.mrb[0].mxu0 %v662
    %v735 = vpop.f32.mrb[0].mxu0
    %v736 = vadd.f32 %v101, %v735
    %v737 = vpop.f32.mrb[0].mxu0
    %738 = vdwg.mxu0
    %v739 = vlaneseq
    %v740 = vshrl.u32 %v739, 7
    %v741 = vsub.s32 0, %v740
    %v742 = vrot.slane %v65, %v741
    %v744 = vsel %vm102, %v96, 0
    %v747 = vsel %vm102, %v97, 0
    %749 = vmatprep.subr.mxu0 0.0
    %750 = vmatpush1.msra.mxu0 %v61
    %751 = vmatprep.subr.mxu0 0.0
    %752 = vmatpush1.msra.mxu0 %v62
    %753 = vmatprep.subr.mxu0 0.0
    %754 = vmatpush1.msra.mxu0 %v63
    %755 = vmatprep.subr.mxu0 0.0
    %756 = vmatpush1.msra.mxu0 %v64
    %757 = vmatprep.subr.mxu0 0.0
    %758 = vmatpush1.msra.mxu0 0.0
    %759 = vmatprep.subr.mxu0 0.0
    %760 = vmatpush1.msra.mxu0 0.0
    %761 = vmatprep.subr.mxu0 0.0
    %762 = vmatpush1.msra.mxu0 0.0
    %763 = vmatprep.subr.mxu0 0.0
    %764 = vmatpush1.msra.mxu0 0.0
    %765 = vmatprep.subr.mxu0 0.0
    %766 = vmatpush1.msra.mxu0 0.0
    %767 = vmatprep.subr.mxu0 0.0
    %768 = vmatpush1.msra.mxu0 0.0
    %769 = vmatprep.subr.mxu0 0.0
    %770 = vmatpush1.msra.mxu0 0.0
    %771 = vmatprep.subr.mxu0 0.0
    %772 = vmatpush1.msra.mxu0 0.0
    %773 = vmatprep.subr.mxu0 0.0
    %774 = vmatpush1.msra.mxu0 0.0
    %775 = vmatprep.subr.mxu0 0.0
    %776 = vmatpush1.msra.mxu0 0.0
    %777 = vmatprep.subr.mxu0 0.0
    %778 = vmatpush1.msra.mxu0 0.0
    %779 = vmatprep.subr.mxu0 0.0
    %780 = vmatpush1.msra.mxu0 0.0
    %781 = vmatprep.subr.mxu0 0.0
    %782 = vmatpush1.msra.mxu0 0.0
    %783 = vmatprep.subr.mxu0 0.0
    %784 = vmatpush1.msra.mxu0 0.0
    %785 = vmatprep.subr.mxu0 0.0
    %786 = vmatpush1.msra.mxu0 0.0
    %787 = vmatprep.subr.mxu0 0.0
    %788 = vmatpush1.msra.mxu0 0.0
    %789 = vmatprep.subr.mxu0 0.0
    %790 = vmatpush1.msra.mxu0 0.0
    %791 = vmatprep.subr.mxu0 0.0
    %792 = vmatpush1.msra.mxu0 0.0
    %793 = vmatprep.subr.mxu0 0.0
    %794 = vmatpush1.msra.mxu0 0.0
    %795 = vmatprep.subr.mxu0 0.0
    %796 = vmatpush1.msra.mxu0 0.0
    %797 = vmatprep.subr.mxu0 0.0
    %798 = vmatpush1.msra.mxu0 0.0
    %799 = vmatprep.subr.mxu0 0.0
    %800 = vmatpush1.msra.mxu0 0.0
    %801 = vmatprep.subr.mxu0 0.0
    %802 = vmatpush1.msra.mxu0 0.0
    %803 = vmatprep.subr.mxu0 0.0
    %804 = vmatpush1.msra.mxu0 0.0
    %805 = vmatprep.subr.mxu0 0.0
    %806 = vmatpush1.msra.mxu0 0.0
    %807 = vmatprep.subr.mxu0 0.0
    %808 = vmatpush1.msra.mxu0 0.0
    %809 = vmatprep.subr.mxu0 0.0
    %810 = vmatpush1.msra.mxu0 0.0
    %811 = vmatprep.subr.mxu0 0.0
    %812 = vmatpush1.msra.mxu0 0.0
    %813 = vmatprep.mubr.f32.mxu0 0.0
    %814 = vmatmul.mubr.f32.gmra.mrb[0].mxu0 %v744
    %v815 = vpop.f32.mrb[0].mxu0
    %v816 = vadd.f32 %v742, %v815
    %v817 = vpop.f32.mrb[0].mxu0
    %818 = vmatprep.mubr.f32.mxu0 0.0
    %819 = vmatmul.mubr.f32.gmra.mrb[0].mxu0 %v747
    %v820 = vpop.f32.mrb[0].mxu0
    %v821 = vadd.f32 %v742, %v820
    %v822 = vpop.f32.mrb[0].mxu0
    %823 = vdwg.mxu0
    %v824 = vmul.f32 %v731, %v193
    %v825 = vmul.f32 %v736, %v195
    %v826 = vmul.f32 %v731, %v197
    %v827 = vmul.f32 %v736, %v199
    %v828 = vmul.f32 %v731, %v201
    %v829 = vmul.f32 %v736, %v203
    %v830 = vmul.f32 %v731, %v205
    %v831 = vmul.f32 %v736, %v207
    %v832 = vmul.f32 %v816, %v82
    %v833 = vmul.f32 %v821, %v83
    %v834 = vmul.f32 %v816, %v84
    %v835 = vmul.f32 %v821, %v85
    %v836 = vmul.f32 %v816, %v86
    %v837 = vmul.f32 %v821, %v87
    %v838 = vmul.f32 %v816, %v88
    %v839 = vmul.f32 %v821, %v89
    %848 = vrot.lane.b32.xlu0 %v824, 96
    %v849 = vpop.permute.xlu0 %848
    %850 = vrot.lane.b32.xlu0 %v825, 96
    %v851 = vpop.permute.xlu0 %850
    %852 = vrot.lane.b32.xlu0 %v826, 96
    %v853 = vpop.permute.xlu0 %852
    %854 = vrot.lane.b32.xlu0 %v827, 96
    %v855 = vpop.permute.xlu0 %854
    %856 = vrot.lane.b32.xlu0 %v828, 96
    %v857 = vpop.permute.xlu0 %856
    %858 = vrot.lane.b32.xlu0 %v829, 96
    %v859 = vpop.permute.xlu0 %858
    %860 = vrot.lane.b32.xlu0 %v830, 96
    %v861 = vpop.permute.xlu0 %860
    %862 = vrot.lane.b32.xlu0 %v831, 96
    %v863 = vpop.permute.xlu0 %862
    %v865 = vsel %vm102, %v731, 0
    %v868 = vsel %vm102, %v736, 0
    %v870 = vsel %vm102, %v849, 0
    %v872 = vsel %vm102, %v851, 0
    %v874 = vsel %vm102, %v853, 0
    %v876 = vsel %vm102, %v855, 0
    %v878 = vsel %vm102, %v857, 0
    %v880 = vsel %vm102, %v859, 0
    %v882 = vsel %vm102, %v861, 0
    %v884 = vsel %vm102, %v863, 0
    %886 = vmatprep.subr.mxu0 0.0
    %887 = vmatpush1.xpose.msra.mxu0 %v870
    %888 = vmatprep.subr.mxu0 0.0
    %889 = vmatpush1.xpose.msra.mxu0 %v872
    %890 = vmatprep.subr.mxu0 0.0
    %891 = vmatpush1.xpose.msra.mxu0 %v874
    %892 = vmatprep.subr.mxu0 0.0
    %893 = vmatpush1.xpose.msra.mxu0 %v876
    %894 = vmatprep.subr.mxu0 0.0
    %895 = vmatpush1.xpose.msra.mxu0 %v878
    %896 = vmatprep.subr.mxu0 0.0
    %897 = vmatpush1.xpose.msra.mxu0 %v880
    %898 = vmatprep.subr.mxu0 0.0
    %899 = vmatpush1.xpose.msra.mxu0 %v882
    %900 = vmatprep.subr.mxu0 0.0
    %901 = vmatpush1.xpose.msra.mxu0 %v884
    %902 = vmatprep.subr.mxu0 0.0
    %903 = vmatpush1.xpose.msra.mxu0 0.0
    %904 = vmatprep.subr.mxu0 0.0
    %905 = vmatpush1.xpose.msra.mxu0 0.0
    %906 = vmatprep.subr.mxu0 0.0
    %907 = vmatpush1.xpose.msra.mxu0 0.0
    %908 = vmatprep.subr.mxu0 0.0
    %909 = vmatpush1.xpose.msra.mxu0 0.0
    %910 = vmatprep.subr.mxu0 0.0
    %911 = vmatpush1.xpose.msra.mxu0 0.0
    %912 = vmatprep.subr.mxu0 0.0
    %913 = vmatpush1.xpose.msra.mxu0 0.0
    %914 = vmatprep.subr.mxu0 0.0
    %915 = vmatpush1.xpose.msra.mxu0 0.0
    %916 = vmatprep.subr.mxu0 0.0
    %917 = vmatpush1.xpose.msra.mxu0 0.0
    %918 = vmatprep.subr.mxu0 0.0
    %919 = vmatpush1.xpose.msra.mxu0 0.0
    %920 = vmatprep.subr.mxu0 0.0
    %921 = vmatpush1.xpose.msra.mxu0 0.0
    %922 = vmatprep.subr.mxu0 0.0
    %923 = vmatpush1.xpose.msra.mxu0 0.0
    %924 = vmatprep.subr.mxu0 0.0
    %925 = vmatpush1.xpose.msra.mxu0 0.0
    %926 = vmatprep.subr.mxu0 0.0
    %927 = vmatpush1.xpose.msra.mxu0 0.0
    %928 = vmatprep.subr.mxu0 0.0
    %929 = vmatpush1.xpose.msra.mxu0 0.0
    %930 = vmatprep.subr.mxu0 0.0
    %931 = vmatpush1.xpose.msra.mxu0 0.0
    %932 = vmatprep.subr.mxu0 0.0
    %933 = vmatpush1.xpose.msra.mxu0 0.0
    %934 = vmatprep.subr.mxu0 0.0
    %935 = vmatpush1.xpose.msra.mxu0 0.0
    %936 = vmatprep.subr.mxu0 0.0
    %937 = vmatpush1.xpose.msra.mxu0 0.0
    %938 = vmatprep.subr.mxu0 0.0
    %939 = vmatpush1.xpose.msra.mxu0 0.0
    %940 = vmatprep.subr.mxu0 0.0
    %941 = vmatpush1.xpose.msra.mxu0 0.0
    %942 = vmatprep.subr.mxu0 0.0
    %943 = vmatpush1.xpose.msra.mxu0 0.0
    %944 = vmatprep.subr.mxu0 0.0
    %945 = vmatpush1.xpose.msra.mxu0 0.0
    %946 = vmatprep.subr.mxu0 0.0
    %947 = vmatpush1.xpose.msra.mxu0 0.0
    %948 = vmatprep.subr.mxu0 0.0
    %949 = vmatpush1.xpose.msra.mxu0 0.0
    %950 = vmatprep.mubr.f32.mxu0 0.0
    %951 = vmatmul.mubr.f32.gmra.mrb[0].mxu0 %v865
    %v952 = vpop.f32.mrb[0].mxu0
    %v953 = vadd.f32 %v90, %v952
    %v954 = vpop.f32.mrb[0].mxu0
    %955 = vmatprep.mubr.f32.mxu0 0.0
    %956 = vmatmul.mubr.f32.gmra.mrb[0].mxu0 %v868
    %v957 = vpop.f32.mrb[0].mxu0
    %v958 = vadd.f32 %v91, %v957
    %v959 = vpop.f32.mrb[0].mxu0
    %960 = vdwg.mxu0
    %v961 = vsel %vm377, %v953, -inf
    %962 = vmax.xlane.f32.xlu0 %v961
    %v963 = vpop.xlane.xlu0 %962
    %v964 = vsel %vm377, %v958, -inf
    %965 = vmax.xlane.f32.xlu0 %v964
    %v966 = vpop.xlane.xlu0 %965
    %v967 = vsub.f32 %v953, %v963
    %v968 = vsub.f32 %v958, %v966
    %v969 = vmul.f32 %v967, 1.442695
    %v970 = vpow.pop %v969
    %v971 = vmul.f32 %v968, 1.442695
    %v972 = vpow.pop %v971
    %v974 = vsel %vm377, %v970, 0
    %v977 = vsel %vm377, %v972, 0
    %979 = vmatprep.subr.mxu0 0.0
    %980 = vmatpush1.msra.mxu0 %v832
    %981 = vmatprep.subr.mxu0 0.0
    %982 = vmatpush1.msra.mxu0 %v833
    %983 = vmatprep.subr.mxu0 0.0
    %984 = vmatpush1.msra.mxu0 %v834
    %985 = vmatprep.subr.mxu0 0.0
    %986 = vmatpush1.msra.mxu0 %v835
    %987 = vmatprep.subr.mxu0 0.0
    %988 = vmatpush1.msra.mxu0 %v836
    %989 = vmatprep.subr.mxu0 0.0
    %990 = vmatpush1.msra.mxu0 %v837
    %991 = vmatprep.subr.mxu0 0.0
    %992 = vmatpush1.msra.mxu0 %v838
    %993 = vmatprep.subr.mxu0 0.0
    %994 = vmatpush1.msra.mxu0 %v839
    %995 = vmatprep.subr.mxu0 0.0
    %996 = vmatpush1.msra.mxu0 0.0
    %997 = vmatprep.subr.mxu0 0.0
    %998 = vmatpush1.msra.mxu0 0.0
    %999 = vmatprep.subr.mxu0 0.0
    %1000 = vmatpush1.msra.mxu0 0.0
    %1001 = vmatprep.subr.mxu0 0.0
    %1002 = vmatpush1.msra.mxu0 0.0
    %1003 = vmatprep.subr.mxu0 0.0
    %1004 = vmatpush1.msra.mxu0 0.0
    %1005 = vmatprep.subr.mxu0 0.0
    %1006 = vmatpush1.msra.mxu0 0.0
    %1007 = vmatprep.subr.mxu0 0.0
    %1008 = vmatpush1.msra.mxu0 0.0
    %1009 = vmatprep.subr.mxu0 0.0
    %1010 = vmatpush1.msra.mxu0 0.0
    %1011 = vmatprep.subr.mxu0 0.0
    %1012 = vmatpush1.msra.mxu0 0.0
    %1013 = vmatprep.subr.mxu0 0.0
    %1014 = vmatpush1.msra.mxu0 0.0
    %1015 = vmatprep.subr.mxu0 0.0
    %1016 = vmatpush1.msra.mxu0 0.0
    %1017 = vmatprep.subr.mxu0 0.0
    %1018 = vmatpush1.msra.mxu0 0.0
    %1019 = vmatprep.subr.mxu0 0.0
    %1020 = vmatpush1.msra.mxu0 0.0
    %1021 = vmatprep.subr.mxu0 0.0
    %1022 = vmatpush1.msra.mxu0 0.0
    %1023 = vmatprep.subr.mxu0 0.0
    %1024 = vmatpush1.msra.mxu0 0.0
    %1025 = vmatprep.subr.mxu0 0.0
    %1026 = vmatpush1.msra.mxu0 0.0
    %1027 = vmatprep.subr.mxu0 0.0
    %1028 = vmatpush1.msra.mxu0 0.0
    %1029 = vmatprep.subr.mxu0 0.0
    %1030 = vmatpush1.msra.mxu0 0.0
    %1031 = vmatprep.subr.mxu0 0.0
    %1032 = vmatpush1.msra.mxu0 0.0
    %1033 = vmatprep.subr.mxu0 0.0
    %1034 = vmatpush1.msra.mxu0 0.0
    %1035 = vmatprep.subr.mxu0 0.0
    %1036 = vmatpush1.msra.mxu0 0.0
    %1037 = vmatprep.subr.mxu0 0.0
    %1038 = vmatpush1.msra.mxu0 0.0
    %1039 = vmatprep.subr.mxu0 0.0
    %1040 = vmatpush1.msra.mxu0 0.0
    %1041 = vmatprep.subr.mxu0 0.0
    %1042 = vmatpush1.msra.mxu0 0.0
    %1043 = vmatprep.mubr.f32.mxu0 0.0
    %1044 = vmatmul.mubr.f32.gmra.mrb[0].mxu0 %v974
    %v1045 = vpop.f32.mrb[0].mxu0
    %v1046 = vadd.f32 0.0, %v1045
    %v1047 = vpop.f32.mrb[0].mxu0
    %1048 = vmatprep.mubr.f32.mxu0 0.0
    %1049 = vmatmul.mubr.f32.gmra.mrb[0].mxu0 %v977
    %v1050 = vpop.f32.mrb[0].mxu0
    %v1051 = vadd.f32 0.0, %v1050
    %v1052 = vpop.f32.mrb[0].mxu0
    %1053 = vdwg.mxu0
    %1056 = vrot.lane.b32.xlu0 %v1046, 96
    %v1057 = vpop.permute.xlu0 %1056
    %1058 = vrot.lane.b32.xlu0 %v1051, 96
    %v1059 = vpop.permute.xlu0 %1058
    %v1062 = vrcp.pop %v1057
    %v1063 = vmul.f32 %v1046, %v1062
    %v1064 = vrcp.pop %v1059
    %v1065 = vmul.f32 %v1051, %v1064
    %v1067 = vsel %vm102, %v1063, 0
    %v1070 = vsel %vm102, %v1065, 0
    %1072 = vmatprep.subr.mxu0 0.0
    %1073 = vmatpush1.msra.mxu0 %v66
    %1074 = vmatprep.subr.mxu0 0.0
    %1075 = vmatpush1.msra.mxu0 %v67
    %1076 = vmatprep.subr.mxu0 0.0
    %1077 = vmatpush1.msra.mxu0 %v68
    %1078 = vmatprep.subr.mxu0 0.0
    %1079 = vmatpush1.msra.mxu0 %v69
    %1080 = vmatprep.subr.mxu0 0.0
    %1081 = vmatpush1.msra.mxu0 0.0
    %1082 = vmatprep.subr.mxu0 0.0
    %1083 = vmatpush1.msra.mxu0 0.0
    %1084 = vmatprep.subr.mxu0 0.0
    %1085 = vmatpush1.msra.mxu0 0.0
    %1086 = vmatprep.subr.mxu0 0.0
    %1087 = vmatpush1.msra.mxu0 0.0
    %1088 = vmatprep.subr.mxu0 0.0
    %1089 = vmatpush1.msra.mxu0 0.0
    %1090 = vmatprep.subr.mxu0 0.0
    %1091 = vmatpush1.msra.mxu0 0.0
    %1092 = vmatprep.subr.mxu0 0.0
    %1093 = vmatpush1.msra.mxu0 0.0
    %1094 = vmatprep.subr.mxu0 0.0
    %1095 = vmatpush1.msra.mxu0 0.0
    %1096 = vmatprep.subr.mxu0 0.0
    %1097 = vmatpush1.msra.mxu0 0.0
    %1098 = vmatprep.subr.mxu0 0.0
    %1099 = vmatpush1.msra.mxu0 0.0
    %1100 = vmatprep.subr.mxu0 0.0
    %1101 = vmatpush1.msra.mxu0 0.0
    %1102 = vmatprep.subr.mxu0 0.0
    %1103 = vmatpush1.msra.mxu0 0.0
    %1104 = vmatprep.subr.mxu0 0.0
    %1105 = vmatpush1.msra.mxu0 0.0
    %1106 = vmatprep.subr.mxu0 0.0
    %1107 = vmatpush1.msra.mxu0 0.0
    %1108 = vmatprep.subr.mxu0 0.0
    %1109 = vmatpush1.msra.mxu0 0.0
    %1110 = vmatprep.subr.mxu0 0.0
    %1111 = vmatpush1.msra.mxu0 0.0
    %1112 = vmatprep.subr.mxu0 0.0
    %1113 = vmatpush1.msra.mxu0 0.0
    %1114 = vmatprep.subr.mxu0 0.0
    %1115 = vmatpush1.msra.mxu0 0.0
    %1116 = vmatprep.subr.mxu0 0.0
    %1117 = vmatpush1.msra.mxu0 0.0
    %1118 = vmatprep.subr.mxu0 0.0
    %1119 = vmatpush1.msra.mxu0 0.0
    %1120 = vmatprep.subr.mxu0 0.0
    %1121 = vmatpush1.msra.mxu0 0.0
    %1122 = vmatprep.subr.mxu0 0.0
    %1123 = vmatpush1.msra.mxu0 0.0
    %1124 = vmatprep.subr.mxu0 0.0
    %1125 = vmatpush1.msra.mxu0 0.0
    %1126 = vmatprep.subr.mxu0 0.0
    %1127 = vmatpush1.msra.mxu0 0.0
    %1128 = vmatprep.subr.mxu0 0.0
    %1129 = vmatpush1.msra.mxu0 0.0
    %1130 = vmatprep.subr.mxu0 0.0
    %1131 = vmatpush1.msra.mxu0 0.0
    %1132 = vmatprep.subr.mxu0 0.0
    %1133 = vmatpush1.msra.mxu0 0.0
    %1134 = vmatprep.subr.mxu0 0.0
    %1135 = vmatpush1.msra.mxu0 0.0
    %1136 = vmatprep.mubr.f32.mxu0 0.0
    %1137 = vmatmul.mubr.f32.gmra.mrb[0].mxu0 %v1067
    %v1138 = vpop.f32.mrb[0].mxu0
    %v1139 = vadd.f32 %v518, %v1138
    %v1140 = vpop.f32.mrb[0].mxu0
    %1141 = vmatprep.mubr.f32.mxu0 0.0
    %1142 = vmatmul.mubr.f32.gmra.mrb[0].mxu0 %v1070
    %v1143 = vpop.f32.mrb[0].mxu0
    %v1144 = vadd.f32 %v518, %v1143
    %v1145 = vpop.f32.mrb[0].mxu0
    %1146 = vdwg.mxu0
    %v1147 = vadd.f32 %v656, %v1139
    %v1148 = vadd.f32 %v657, %v1144
    %v1149 = vsel %vm102, %v1147, 0.0
    %1150 = vadd.xlane.f32.xlu0 %v1149
    %v1151 = vpop.xlane.xlu0 %1150
    %v1152 = vsel %vm102, %v1148, 0.0
    %1153 = vadd.xlane.f32.xlu0 %v1152
    %v1154 = vpop.xlane.xlu0 %1153
    %v1155 = vrot.slane %v1151, 4
    %v1156 = vadd.f32 %v1151, %v1155
    %v1157 = vrot.slane %v1156, 2
    %v1158 = vadd.f32 %v1156, %v1157
    %v1159 = vrot.slane %v1158, 1
    %v1160 = vadd.f32 %v1158, %v1159
    %v1161 = vrot.slane %v1154, 4
    %v1162 = vadd.f32 %v1154, %v1161
    %v1163 = vrot.slane %v1162, 2
    %v1164 = vadd.f32 %v1162, %v1163
    %v1165 = vrot.slane %v1164, 1
    %v1166 = vadd.f32 %v1164, %v1165
    %v1167 = vmul.f32 %v1160, 0.00390625
    %v1168 = vmul.f32 %v1166, 0.00390625
    %v1169 = vmul.f32 %v1147, %v1147
    %v1170 = vmul.f32 %v1148, %v1148
    %v1171 = vsel %vm102, %v1169, 0.0
    %1172 = vadd.xlane.f32.xlu0 %v1171
    %v1173 = vpop.xlane.xlu0 %1172
    %v1174 = vsel %vm102, %v1170, 0.0
    %1175 = vadd.xlane.f32.xlu0 %v1174
    %v1176 = vpop.xlane.xlu0 %1175
    %v1177 = vrot.slane %v1173, 4
    %v1178 = vadd.f32 %v1173, %v1177
    %v1179 = vrot.slane %v1178, 2
    %v1180 = vadd.f32 %v1178, %v1179
    %v1181 = vrot.slane %v1180, 1
    %v1182 = vadd.f32 %v1180, %v1181
    %v1183 = vrot.slane %v1176, 4
    %v1184 = vadd.f32 %v1176, %v1183
    %v1185 = vrot.slane %v1184, 2
    %v1186 = vadd.f32 %v1184, %v1185
    %v1187 = vrot.slane %v1186, 1
    %v1188 = vadd.f32 %v1186, %v1187
    %v1189 = vmul.f32 %v1182, 0.00390625
    %v1190 = vmul.f32 %v1188, 0.00390625
    %v1191 = vmul.f32 %v1167, %v1167
    %v1192 = vmul.f32 %v1168, %v1168
    %v1193 = vsub.f32 %v1189, %v1191
    %v1194 = vsub.f32 %v1190, %v1192
    %v1195 = vmax.f32 %v1193, 0.0
    %v1196 = vmax.f32 %v1194, 0.0
    %v1197 = vsub.f32 %v1147, %v1167
    %v1198 = vsub.f32 %v1148, %v1168
    %v1199 = vadd.f32 %v1195, 1e-05
    %v1200 = vadd.f32 %v1196, 1e-05
    %v1201 = vrsqrt.pop %v1199
    %v1202 = vrsqrt.pop %v1200
    %v1203 = vmul.f32 %v1197, %v1201
    %v1204 = vmul.f32 %v1198, %v1202
    %v1205 = vlaneseq
    %v1206 = vshrl.u32 %v1205, 7
    %v1207 = vsub.s32 0, %v1206
    %v1208 = vrot.slane %v75, %v1207
    %v1210 = vsel %vm102, %v1203, 0
    %v1213 = vsel %vm102, %v1204, 0
    %1215 = vmatprep.subr.mxu0 0.0
    %1216 = vmatpush1.msra.mxu0 %v71
    %1217 = vmatprep.subr.mxu0 0.0
    %1218 = vmatpush1.msra.mxu0 %v72
    %1219 = vmatprep.subr.mxu0 0.0
    %1220 = vmatpush1.msra.mxu0 %v73
    %1221 = vmatprep.subr.mxu0 0.0
    %1222 = vmatpush1.msra.mxu0 %v74
    %1223 = vmatprep.subr.mxu0 0.0
    %1224 = vmatpush1.msra.mxu0 0.0
    %1225 = vmatprep.subr.mxu0 0.0
    %1226 = vmatpush1.msra.mxu0 0.0
    %1227 = vmatprep.subr.mxu0 0.0
    %1228 = vmatpush1.msra.mxu0 0.0
    %1229 = vmatprep.subr.mxu0 0.0
    %1230 = vmatpush1.msra.mxu0 0.0
    %1231 = vmatprep.subr.mxu0 0.0
    %1232 = vmatpush1.msra.mxu0 0.0
    %1233 = vmatprep.subr.mxu0 0.0
    %1234 = vmatpush1.msra.mxu0 0.0
    %1235 = vmatprep.subr.mxu0 0.0
    %1236 = vmatpush1.msra.mxu0 0.0
    %1237 = vmatprep.subr.mxu0 0.0
    %1238 = vmatpush1.msra.mxu0 0.0
    %1239 = vmatprep.subr.mxu0 0.0
    %1240 = vmatpush1.msra.mxu0 0.0
    %1241 = vmatprep.subr.mxu0 0.0
    %1242 = vmatpush1.msra.mxu0 0.0
    %1243 = vmatprep.subr.mxu0 0.0
    %1244 = vmatpush1.msra.mxu0 0.0
    %1245 = vmatprep.subr.mxu0 0.0
    %1246 = vmatpush1.msra.mxu0 0.0
    %1247 = vmatprep.subr.mxu0 0.0
    %1248 = vmatpush1.msra.mxu0 0.0
    %1249 = vmatprep.subr.mxu0 0.0
    %1250 = vmatpush1.msra.mxu0 0.0
    %1251 = vmatprep.subr.mxu0 0.0
    %1252 = vmatpush1.msra.mxu0 0.0
    %1253 = vmatprep.subr.mxu0 0.0
    %1254 = vmatpush1.msra.mxu0 0.0
    %1255 = vmatprep.subr.mxu0 0.0
    %1256 = vmatpush1.msra.mxu0 0.0
    %1257 = vmatprep.subr.mxu0 0.0
    %1258 = vmatpush1.msra.mxu0 0.0
    %1259 = vmatprep.subr.mxu0 0.0
    %1260 = vmatpush1.msra.mxu0 0.0
    %1261 = vmatprep.subr.mxu0 0.0
    %1262 = vmatpush1.msra.mxu0 0.0
    %1263 = vmatprep.subr.mxu0 0.0
    %1264 = vmatpush1.msra.mxu0 0.0
    %1265 = vmatprep.subr.mxu0 0.0
    %1266 = vmatpush1.msra.mxu0 0.0
    %1267 = vmatprep.subr.mxu0 0.0
    %1268 = vmatpush1.msra.mxu0 0.0
    %1269 = vmatprep.subr.mxu0 0.0
    %1270 = vmatpush1.msra.mxu0 0.0
    %1271 = vmatprep.subr.mxu0 0.0
    %1272 = vmatpush1.msra.mxu0 0.0
    %1273 = vmatprep.subr.mxu0 0.0
    %1274 = vmatpush1.msra.mxu0 0.0
    %1275 = vmatprep.subr.mxu0 0.0
    %1276 = vmatpush1.msra.mxu0 0.0
    %1277 = vmatprep.subr.mxu0 0.0
    %1278 = vmatpush1.msra.mxu0 0.0
    %1279 = vmatprep.mubr.f32.mxu0 0.0
    %1280 = vmatmul.mubr.f32.gmra.mrb[0].mxu0 %v1210
    %v1281 = vpop.f32.mrb[0].mxu0
    %v1282 = vadd.f32 %v1208, %v1281
    %v1283 = vpop.f32.mrb[0].mxu0
    %1284 = vmatprep.mubr.f32.mxu0 0.0
    %1285 = vmatmul.mubr.f32.gmra.mrb[0].mxu0 %v1213
    %v1286 = vpop.f32.mrb[0].mxu0
    %v1287 = vadd.f32 %v1208, %v1286
    %v1288 = vpop.f32.mrb[0].mxu0
    %1289 = vdwg.mxu0
    %v1290 = vmax.f32 %v1282, 0.0
    %v1291 = vmax.f32 %v1287, 0.0
    %v1292 = vlaneseq
    %v1293 = vshrl.u32 %v1292, 7
    %v1294 = vsub.s32 0, %v1293
    %v1295 = vrot.slane %v80, %v1294
    %v1297 = vsel %vm377, %v1290, 0
    %v1300 = vsel %vm377, %v1291, 0
    %v1303 = vsel %vm377, %v76, 0
    %v1306 = vsel %vm377, %v77, 0
    %v1309 = vsel %vm377, %v78, 0
    %v1312 = vsel %vm377, %v79, 0
    %1314 = vmatprep.subr.mxu0 0.0
    %1315 = vmatpush1.xpose.msra.mxu0 %v1303
    %1316 = vmatprep.subr.mxu0 0.0
    %1317 = vmatpush1.xpose.msra.mxu0 %v1306
    %1318 = vmatprep.subr.mxu0 0.0
    %1319 = vmatpush1.xpose.msra.mxu0 %v1309
    %1320 = vmatprep.subr.mxu0 0.0
    %1321 = vmatpush1.xpose.msra.mxu0 %v1312
    %1322 = vmatprep.subr.mxu0 0.0
    %1323 = vmatpush1.xpose.msra.mxu0 0.0
    %1324 = vmatprep.subr.mxu0 0.0
    %1325 = vmatpush1.xpose.msra.mxu0 0.0
    %1326 = vmatprep.subr.mxu0 0.0
    %1327 = vmatpush1.xpose.msra.mxu0 0.0
    %1328 = vmatprep.subr.mxu0 0.0
    %1329 = vmatpush1.xpose.msra.mxu0 0.0
    %1330 = vmatprep.subr.mxu0 0.0
    %1331 = vmatpush1.xpose.msra.mxu0 0.0
    %1332 = vmatprep.subr.mxu0 0.0
    %1333 = vmatpush1.xpose.msra.mxu0 0.0
    %1334 = vmatprep.subr.mxu0 0.0
    %1335 = vmatpush1.xpose.msra.mxu0 0.0
    %1336 = vmatprep.subr.mxu0 0.0
    %1337 = vmatpush1.xpose.msra.mxu0 0.0
    %1338 = vmatprep.subr.mxu0 0.0
    %1339 = vmatpush1.xpose.msra.mxu0 0.0
    %1340 = vmatprep.subr.mxu0 0.0
    %1341 = vmatpush1.xpose.msra.mxu0 0.0
    %1342 = vmatprep.subr.mxu0 0.0
    %1343 = vmatpush1.xpose.msra.mxu0 0.0
    %1344 = vmatprep.subr.mxu0 0.0
    %1345 = vmatpush1.xpose.msra.mxu0 0.0
    %1346 = vmatprep.subr.mxu0 0.0
    %1347 = vmatpush1.xpose.msra.mxu0 0.0
    %1348 = vmatprep.subr.mxu0 0.0
    %1349 = vmatpush1.xpose.msra.mxu0 0.0
    %1350 = vmatprep.subr.mxu0 0.0
    %1351 = vmatpush1.xpose.msra.mxu0 0.0
    %1352 = vmatprep.subr.mxu0 0.0
    %1353 = vmatpush1.xpose.msra.mxu0 0.0
    %1354 = vmatprep.subr.mxu0 0.0
    %1355 = vmatpush1.xpose.msra.mxu0 0.0
    %1356 = vmatprep.subr.mxu0 0.0
    %1357 = vmatpush1.xpose.msra.mxu0 0.0
    %1358 = vmatprep.subr.mxu0 0.0
    %1359 = vmatpush1.xpose.msra.mxu0 0.0
    %1360 = vmatprep.subr.mxu0 0.0
    %1361 = vmatpush1.xpose.msra.mxu0 0.0
    %1362 = vmatprep.subr.mxu0 0.0
    %1363 = vmatpush1.xpose.msra.mxu0 0.0
    %1364 = vmatprep.subr.mxu0 0.0
    %1365 = vmatpush1.xpose.msra.mxu0 0.0
    %1366 = vmatprep.subr.mxu0 0.0
    %1367 = vmatpush1.xpose.msra.mxu0 0.0
    %1368 = vmatprep.subr.mxu0 0.0
    %1369 = vmatpush1.xpose.msra.mxu0 0.0
    %1370 = vmatprep.subr.mxu0 0.0
    %1371 = vmatpush1.xpose.msra.mxu0 0.0
    %1372 = vmatprep.subr.mxu0 0.0
    %1373 = vmatpush1.xpose.msra.mxu0 0.0
    %1374 = vmatprep.subr.mxu0 0.0
    %1375 = vmatpush1.xpose.msra.mxu0 0.0
    %1376 = vmatprep.subr.mxu0 0.0
    %1377 = vmatpush1.xpose.msra.mxu0 0.0
    %1378 = vmatprep.mubr.f32.mxu0 0.0
    %1379 = vmatmul.mubr.f32.gmra.mrb[0].mxu0 %v1297
    %v1380 = vpop.f32.mrb[0].mxu0
    %v1381 = vadd.f32 %v1295, %v1380
    %v1382 = vpop.f32.mrb[0].mxu0
    %1383 = vmatprep.mubr.f32.mxu0 0.0
    %1384 = vmatmul.mubr.f32.gmra.mrb[0].mxu0 %v1300
    %v1385 = vpop.f32.mrb[0].mxu0
    %v1386 = vadd.f32 %v1295, %v1385
    %v1387 = vpop.f32.mrb[0].mxu0
    %1388 = vdwg.mxu0
    %v1389 = vadd.f32 %v1203, %v1381
    %v1390 = vadd.f32 %v1204, %v1386
    %v1391 = vsel %vm102, %v1389, 0.0
    %1392 = vadd.xlane.f32.xlu0 %v1391
    %v1393 = vpop.xlane.xlu0 %1392
    %v1394 = vsel %vm102, %v1390, 0.0
    %1395 = vadd.xlane.f32.xlu0 %v1394
    %v1396 = vpop.xlane.xlu0 %1395
    %v1397 = vrot.slane %v1393, 4
    %v1398 = vadd.f32 %v1393, %v1397
    %v1399 = vrot.slane %v1398, 2
    %v1400 = vadd.f32 %v1398, %v1399
    %v1401 = vrot.slane %v1400, 1
    %v1402 = vadd.f32 %v1400, %v1401
    %v1403 = vrot.slane %v1396, 4
    %v1404 = vadd.f32 %v1396, %v1403
    %v1405 = vrot.slane %v1404, 2
    %v1406 = vadd.f32 %v1404, %v1405
    %v1407 = vrot.slane %v1406, 1
    %v1408 = vadd.f32 %v1406, %v1407
    %v1409 = vmul.f32 %v1402, 0.00390625
    %v1410 = vmul.f32 %v1408, 0.00390625
    %v1411 = vmul.f32 %v1389, %v1389
    %v1412 = vmul.f32 %v1390, %v1390
    %v1413 = vsel %vm102, %v1411, 0.0
    %1414 = vadd.xlane.f32.xlu0 %v1413
    %v1415 = vpop.xlane.xlu0 %1414
    %v1416 = vsel %vm102, %v1412, 0.0
    %1417 = vadd.xlane.f32.xlu0 %v1416
    %v1418 = vpop.xlane.xlu0 %1417
    %v1419 = vrot.slane %v1415, 4
    %v1420 = vadd.f32 %v1415, %v1419
    %v1421 = vrot.slane %v1420, 2
    %v1422 = vadd.f32 %v1420, %v1421
    %v1423 = vrot.slane %v1422, 1
    %v1424 = vadd.f32 %v1422, %v1423
    %v1425 = vrot.slane %v1418, 4
    %v1426 = vadd.f32 %v1418, %v1425
    %v1427 = vrot.slane %v1426, 2
    %v1428 = vadd.f32 %v1426, %v1427
    %v1429 = vrot.slane %v1428, 1
    %v1430 = vadd.f32 %v1428, %v1429
    %v1431 = vmul.f32 %v1424, 0.00390625
    %v1432 = vmul.f32 %v1430, 0.00390625
    %v1433 = vmul.f32 %v1409, %v1409
    %v1434 = vmul.f32 %v1410, %v1410
    %v1435 = vsub.f32 %v1431, %v1433
    %v1436 = vsub.f32 %v1432, %v1434
    %v1437 = vmax.f32 %v1435, 0.0
    %v1438 = vmax.f32 %v1436, 0.0
    %v1439 = vsub.f32 %v1389, %v1409
    %v1440 = vsub.f32 %v1390, %v1410
    %v1441 = vadd.f32 %v1437, 1e-05
    %v1442 = vadd.f32 %v1438, 1e-05
    %v1443 = vrsqrt.pop %v1441
    %v1444 = vrsqrt.pop %v1442
    %v1445 = vmul.f32 %v1439, %v1443
    %v1446 = vmul.f32 %v1440, %v1444
    %1447 = vst.msk [vmem:[#allocation8] sm:$0xff] %vm102, %v1445
    %1448 = vst.msk [vmem:[#allocation8 + $0x8] sm:$0xff] %vm102, %v1446
    // Predicated region
    $region26: #{tpu_custom_call.1} parent=1 // pred_check
      _
    $region27: #{tpu_custom_call.1} parent=1 // pred_check_branch
      %1450 = sbr.rel (0) target = $region29
    $region28: #{tpu_custom_call.1} parent=1 // pred_region
      %s1452 = ssub.s32 256, 256
      %1453 = vsyncadd [#allocation4], %s1452
      %s1454 = sshll.u32 [#allocation8], 4
      %s1455 = int_to_ptr.vmem [resolvable:$true] %s1454
      %1460 = dma.vmem_to_hbm [thread:$0]  %s1455, 256, %s3, [#allocation4], 128, 128, 8
    $region29: #{tpu_custom_call.1} parent=1 // pred_fallthru
      _
    // Predicated region
    $region30: #{tpu_custom_call.1} parent=1 // pred_check
      _
    $region31: #{tpu_custom_call.1} parent=1 // pred_check_branch
      %1462 = sbr.rel (0) target = $region33
    $region32: #{tpu_custom_call.1} parent=1 // pred_region
      %1463 = dma.done [#allocation4], 256
    $region33: #{tpu_custom_call.1} parent=1 // pred_fallthru
      _
    %1464 = vsyncpa [#allocation3], 1
    %1465 = vsyncpa [#allocation6], 1
    %1466 = vsyncpa [#allocation4], 1

</llo_original>
